<compile_context>
chip_gen: v7x
topology: tpu7x:2x2x1
jax: 0.10.0
libtpu: 0.0.40
codegen_flags: <defaults>
</compile_context>

<pallas_src>
import functools
import math

import jax
import jax.numpy as jnp
from jax.experimental import pallas as pl
from jax.experimental.pallas import tpu as pltpu


# ----------------------------------------------------------------------------
# Pallas kernel: fused (folded-deconv matmul + bias + activation) per tile
# ----------------------------------------------------------------------------
def _deconv_mm_kernel(x_ref, w_ref, b_ref, o_ref, *, act):
    # x_ref: (Cin, bm)   w_ref: (K3C, Cin) bf16   b_ref: (K3C, 1) f32
    # o_ref: (K3C, bm)   bf16 (lane-dense unmasked stores)
    x = x_ref[...].astype(jnp.bfloat16)                    # no-op if already bf16
    y = jnp.dot(w_ref[...], x, preferred_element_type=jnp.float32)   # f32 acc
    y = y + b_ref[...].astype(jnp.float32)                 # f32 epilogue (lane bcast)
    if act == "relu":
        y = jnp.maximum(y, 0.0)
    o_ref[...] = y.astype(o_ref.dtype)


# ----------------------------------------------------------------------------
# Helpers
# ----------------------------------------------------------------------------
def _round_up(v, m):
    return (v + m - 1) // m * m


def _pick_bm(m, target):
    """Largest multiple of 128 that divides m and is <= target (None if none)."""
    best = None
    b = 128
    while b <= min(m, target):
        if m % b == 0:
            best = b
        b += 128
    return best


# ----------------------------------------------------------------------------
# Public module: NCDHW in -> NCDHW out (PyTorch layout, no layout transposes)
# ----------------------------------------------------------------------------
def upsampling_deconv_block(params, x_ncdhw, *, stride=2, n_filters_out,
                            normalization="none", activation="relu",
                            bm_target=2048, out_dtype=jnp.bfloat16):
    if normalization != "none":
        # TODO(synk): batchnorm/groupnorm/instancenorm branches not implemented
        # (module default is 'none').
        raise NotImplementedError("only normalization='none' is implemented")

    N, Cin, D, H, W = x_ncdhw.shape
    s = int(stride)
    Cout = int(n_filters_out)
    K3C = s * s * s * Cout
    w_t = params["w"]          # (K3C, Cin) bf16, rows ordered (kz, ky, kx, co)
    b_col = params["b"]        # (K3C, 1) f32
    assert w_t.shape == (K3C, Cin)
    assert Cin % 8 == 0, "Cin must be a multiple of 8 for TPU sublane tiling"

    M = D * H * W
    # NCDHW is already (channels, flattened-space) per batch sample: this
    # reshape is contiguous -> no HBM layout pass.
    x2d = x_ncdhw.reshape(N * Cin, M)

    bm = _pick_bm(M, bm_target) if M % 128 == 0 else None
    if bm is None:
        # Ragged spatial extent (rare): pad the flattened-space axis.
        Mp = _round_up(M, bm_target if M >= bm_target else 128)
        bm = min(bm_target, Mp)
        x2d = jnp.pad(x2d, ((0, 0), (0, Mp - M)))
    else:
        Mp = M
    # Keep >= 2 grid steps so both v7x TensorCores get work.
    if N * (Mp // bm) < 2:
        smaller = _pick_bm(Mp, bm // 2)
        if smaller is not None:
            bm = smaller

    grid = (N, Mp // bm)

    # VMEM budget: double-buffered streamed in/out tiles + resident weight/bias
    # (lane/sublane padding accounted for); capped at 32 MiB for v7x headroom.
    in_tile = _round_up(Cin, 8) * bm * jnp.dtype(x2d.dtype).itemsize
    out_tile = _round_up(K3C, 8) * bm * jnp.dtype(out_dtype).itemsize
    w_bytes = _round_up(K3C, 8) * _round_up(Cin, 128) * jnp.dtype(w_t.dtype).itemsize
    b_bytes = _round_up(K3C, 8) * 128 * 4
    vmem_limit = int(min(32 << 20,
                         max(16 << 20,
                             4 * (in_tile + out_tile) + 2 * (w_bytes + b_bytes))))

    out2d = pl.pallas_call(
        functools.partial(_deconv_mm_kernel, act=activation),
        out_shape=jax.ShapeDtypeStruct((N * K3C, Mp), out_dtype),
        grid=grid,
        in_specs=[pl.BlockSpec((Cin, bm), lambda n, i: (n, i)),    # activations
                  pl.BlockSpec((K3C, Cin), lambda n, i: (0, 0)),   # folded weight
                  pl.BlockSpec((K3C, 1), lambda n, i: (0, 0))],    # bias
        out_specs=pl.BlockSpec((K3C, bm), lambda n, i: (n, i)),
        compiler_params=pltpu.CompilerParams(
            dimension_semantics=("parallel", "parallel"),
            vmem_limit_bytes=vmem_limit),
    )(x2d, w_t, b_col)

    # Depth-to-space + channel reorder: ONE XLA copy pass on the bf16 output,
    # directly to NCDHW (no separate NCDHW<->NDHWC transposes).
    y = out2d[:, :M].reshape(N, s, s, s, Cout, D, H, W)
    y = jnp.transpose(y, (0, 4, 5, 1, 6, 2, 7, 3))
    return y.reshape(N, Cout, D * s, H * s, W * s)


# ----------------------------------------------------------------------------
# Parameters (matches torch ConvTranspose3d.reset_parameters:
# kaiming_uniform_(a=sqrt(5)) -> U(-1/sqrt(fan_in), 1/sqrt(fan_in)),
# fan_in = out_channels * k^3 for ConvTranspose weight (in, out, k, k, k))
# ----------------------------------------------------------------------------
def init_params(key, n_in, n_out, stride=2, w_dtype=jnp.bfloat16):
    k = int(stride)
    fan_in = n_out * k * k * k
    bound = 1.0 / math.sqrt(fan_in)
    kw, kb = jax.random.split(key)
    w_torch = jax.random.uniform(kw, (n_in, n_out, k, k, k), jnp.float32,
                                 -bound, bound)
    b = jax.random.uniform(kb, (n_out,), jnp.float32, -bound, bound)
    # Fold to (K3C, Cin), row order (kz, ky, kx, co).
    w_t = jnp.transpose(w_torch, (2, 3, 4, 1, 0)).reshape(k * k * k * n_out, n_in)
    b_col = jnp.tile(b, k * k * k).reshape(-1, 1)
    return {"w": w_t.astype(w_dtype), "b": b_col,
            "w_torch": w_torch, "b_torch": b}


# ----------------------------------------------------------------------------
# Reference (pure JAX, f32) for a sanity check
# ----------------------------------------------------------------------------
def _reference(params, x_ncdhw, stride, n_out):
    s = int(stride)
    x = jnp.transpose(x_ncdhw.astype(jnp.float32), (0, 2, 3, 4, 1))   # NDHWC
    N, Z, Y, X, _ = x.shape
    y = jnp.einsum("nzyxi,ioabc->nzyxabco", x, params["w_torch"])
    y = y + params["b_torch"]
    y = jnp.maximum(y, 0.0)
    y = jnp.transpose(y, (0, 1, 4, 2, 5, 3, 6, 7)).reshape(
        N, Z * s, Y * s, X * s, n_out)
    return jnp.transpose(y, (0, 4, 1, 2, 3))


if __name__ == "__main__":
    key = jax.random.PRNGKey(0)
    pkey, xkey = jax.random.split(key)

    n_in, n_out, stride = 32, 16, 2
    params = init_params(pkey, n_in, n_out, stride)

    # PyTorch-style input (N, C, D, H, W).  Activations kept bf16 model-wide
    # per the perf review (halves the kernel's input HBM traffic).
    x = jax.random.normal(xkey, (2, n_in, 8, 16, 16), jnp.float32).astype(jnp.bfloat16)

    fwd = jax.jit(functools.partial(upsampling_deconv_block, stride=stride,
                                    n_filters_out=n_out, activation="relu"))
    out = jax.block_until_ready(fwd(params, x))

    assert out.shape == (2, n_out, 16, 32, 32), out.shape
    assert out.dtype == jnp.bfloat16, out.dtype
    assert bool(jnp.all(jnp.isfinite(out.astype(jnp.float32))))

    # Numerical sanity vs pure-JAX f32 reference (bf16 MXU/IO -> loose tolerance)
    ref = jax.block_until_ready(_reference(params, x, stride, n_out))
    assert bool(jnp.allclose(out.astype(jnp.float32), ref, atol=5e-2, rtol=5e-2))

    print("KERNEL_OK")
</pallas_src>

<mosaic_0001>
module attributes {stable_mosaic.version = 11 : i64} {
  func.func @_deconv_mm_kernel(%arg0: i32, %arg1: i32, %arg2: memref<32x2048xbf16, #tpu.memory_space<vmem>>, %arg3: memref<128x32xbf16, #tpu.memory_space<vmem>>, %arg4: memref<128x1xf32, #tpu.memory_space<vmem>>, %arg5: memref<128x2048xbf16, #tpu.memory_space<vmem>>) attributes {dimension_semantics = [#tpu.dimension_semantics<parallel>, #tpu.dimension_semantics<parallel>], iteration_bounds = array<i64: 2, 1>, scalar_prefetch = 0 : i64, scratch_operands = 0 : i64, tpu.core_type = #tpu.core_type<tc>, window_params = [{transform_indices = @transform_0, window_bounds = array<i64: 32, 2048>}, {pipeline_mode = #tpu.pipeline_mode<synchronous>, transform_indices = @transform_1, window_bounds = array<i64: 128, 32>}, {pipeline_mode = #tpu.pipeline_mode<synchronous>, transform_indices = @transform_2, window_bounds = array<i64: 128, 1>}, {transform_indices = @transform_3, window_bounds = array<i64: 128, 2048>}]} {
    %c0 = arith.constant 0 : index
    %c0_0 = arith.constant 0 : index
    %0 = vector.load %arg2[%c0, %c0_0] : memref<32x2048xbf16, #tpu.memory_space<vmem>>, vector<32x2048xbf16>
    %c0_1 = arith.constant 0 : index
    %c0_2 = arith.constant 0 : index
    %1 = vector.load %arg3[%c0_1, %c0_2] : memref<128x32xbf16, #tpu.memory_space<vmem>>, vector<128x32xbf16>
    %cst = arith.constant dense<0.000000e+00> : vector<128x2048xf32>
    %2 = tpu.matmul %1, %0, %cst {dimension_numbers = #tpu.dot_dimension_numbers<[1], [0], [0], [1], [0, 0, 1, 1], [], []>} : vector<128x32xbf16>, vector<32x2048xbf16>, vector<128x2048xf32> -> vector<128x2048xf32>
    %c0_3 = arith.constant 0 : index
    %c0_4 = arith.constant 0 : index
    %3 = vector.load %arg4[%c0_3, %c0_4] : memref<128x1xf32, #tpu.memory_space<vmem>>, vector<128x1xf32>
    %4 = vector.broadcast %3 : vector<128x1xf32> to vector<128x2048xf32>
    %5 = arith.addf %2, %4 : vector<128x2048xf32>
    %cst_5 = arith.constant 0.000000e+00 : f32
    %6 = vector.broadcast %cst_5 : f32 to vector<128x2048xf32>
    %7 = arith.maximumf %5, %6 : vector<128x2048xf32>
    %8 = arith.truncf %7 : vector<128x2048xf32> to vector<128x2048xbf16>
    %c0_6 = arith.constant 0 : index
    %c0_7 = arith.constant 0 : index
    %9 = vector.load %arg5[%c0_6, %c0_7] : memref<128x2048xbf16, #tpu.memory_space<vmem>>, vector<128x2048xbf16>
    tpu.vector_store %arg5[%c0_6, %c0_7], %8 {strides = array<i32>} : memref<128x2048xbf16, #tpu.memory_space<vmem>>, vector<128x2048xbf16>,
    return
  }
  func.func @transform_0(%arg0: i32, %arg1: i32) -> (i32, i32) {
    %c0_i32 = arith.constant 0 : i32
    return %arg0, %arg1 : i32, i32
  }
  func.func @transform_1(%arg0: i32, %arg1: i32) -> (i32, i32) {
    %c0_i32 = arith.constant 0 : i32
    %c0_i32_0 = arith.constant 0 : i32
    %c0_i32_1 = arith.constant 0 : i32
    return %c0_i32, %c0_i32_0 : i32, i32
  }
  func.func @transform_2(%arg0: i32, %arg1: i32) -> (i32, i32) {
    %c0_i32 = arith.constant 0 : i32
    %c0_i32_0 = arith.constant 0 : i32
    %c0_i32_1 = arith.constant 0 : i32
    return %c0_i32, %c0_i32_0 : i32, i32
  }
  func.func @transform_3(%arg0: i32, %arg1: i32) -> (i32, i32) {
    %c0_i32 = arith.constant 0 : i32
    return %arg0, %arg1 : i32, i32
  }
}

</mosaic_0001>

<llo_original>
// kernel: upsampling_deconv_block.1
$region0: #{upsampling_deconv_block.1}
  #allocation0 [shape = 'u32[]', space=smem, size = 0x4, offset = 0x4, fixed_abs, tag = 'smem constant byte address 0x4 - core index']
  #allocation1 [shape = 'u32[144,128]{1,0:T(1,128)}', space=vmem, size = 0x12000, scoped, tag = 'internal scratch']
  %s0 = inlined_call_operand.vmem [shape: bf16[64,2048], index: 0, kind: input, shape index: {}]
  %s1 = inlined_call_operand.vmem [shape: bf16[128,32], index: 1, kind: input, shape index: {}]
  %s2 = inlined_call_operand.vmem [shape: f32[128,1], index: 2, kind: input, shape index: {}]
  %s3 = inlined_call_operand.vmem [shape: bf16[256,2048], index: 3, kind: output, shape index: {}]
  %s4 = sld [smem:[#allocation0]]
  $region45: #{upsampling_deconv_block.1} parent=0
    _
  %s6 = ssub.s32 1, %s4
  %s7 = scalar_select 0, %s6, %s4
  loop: start=0, step=1, limit=4
  $region2: #{upsampling_deconv_block.1} parent=0 // loop_pre_header
    _
  $region3: #{upsampling_deconv_block.1} parent=0 // loop_header
    %s9 = sphi 0, %s13
    %p10 = scmp.ge.s32.totalorder %s9, 4
    %s16 = sphi 0, %s28
    %s17 = sphi 0, %s24
    %s18 = sphi 0, %s16
    %s19 = sphi 0, %s17
    %s20 = sphi 0, %s18
    %s21 = sphi 0, %s19
    %s33 = sphi 0, %s35
    %s36 = sphi 0, %s33
    %s37 = sphi 0, %s36
    %s53 = sphi 0, %s37
    %s57 = sphi 0, %s57
    %s59 = sphi 0, %s57
    %s60 = sphi 0, %s59
    %s74 = sphi 0, %s60
    %s78 = sphi 0, %s78
    %s80 = sphi 0, %s78
    %s81 = sphi 0, %s80
    %s95 = sphi 0, %s81
    %s103 = sphi 0, %s105
    %s106 = sphi 0, %s103
    %s107 = sphi 0, %s106
    %s123 = sphi 0, %s107
  $region4: #{upsampling_deconv_block.1} parent=0 // loop_header_branch
    %12 = sbr.rel (%p10) target = $region8
  $region5: #{upsampling_deconv_block.1} parent=0 // loop_body
    %s14 = ssub.s32 %s9, 1
    %s15 = ssub.s32 %s9, 2
    %s22 = sadd.s32 1, %s17
    %p23 = scmp.ge.s32.totalorder %s22, 1
    %s24 = scalar_select %p23, 0, %s22
    %s25 = sadd.s32 1, %s16
    %s26 = scalar_select %p23, %s25, %s16
    %p27 = scmp.ge.s32.totalorder %s26, 2
    %s28 = scalar_select %p27, 0, %s26
    %s29 = ssub.s32 %s16, %s28
    %s30 = ssub.s32 %s17, %s24
    %s31 = sor.u32 %s29, %s30
    %p32 = scmp.eq.s32.totalorder %s31, 0
    %s34 = sadd.s32 %s33, 1
    %s35 = scalar_select %p32, %s33, %s34
    %p38 = pneg %p32
    %p39 = scmp.eq.s32.totalorder %s9, 1
    %p40 = por %p38, %p39
    %p41 = scmp.ne.s32.totalorder %s33, %s36
    %p42 = scmp.eq.s32.totalorder %s9, 0
    %p43 = por %p41, %p42
    %p44 = scmp.ne.s32.totalorder %s33, %s36
    %p45 = scmp.eq.s32.totalorder %s14, 1
    %p46 = por %p44, %p45
    %p47 = scmp.ne.s32.totalorder %s36, %s37
    %p48 = scmp.eq.s32.totalorder %s14, 0
    %p49 = por %p47, %p48
    %p50 = scmp.ne.s32.totalorder %s36, %s37
    %p51 = scmp.eq.s32.totalorder %s15, 1
    %p52 = por %p50, %p51
    %p54 = scmp.ne.s32.totalorder %s37, %s53
    %p55 = scmp.eq.s32.totalorder %s15, 0
    %p56 = por %p54, %p55
    %s58 = sadd.s32 %s57, 1
    %p61 = scmp.eq.s32.totalorder %s9, 1
    %p62 = scmp.ne.s32.totalorder %s57, %s59
    %p63 = scmp.eq.s32.totalorder %s9, 0
    %p64 = por %p62, %p63
    %p65 = scmp.ne.s32.totalorder %s57, %s59
    %p66 = scmp.eq.s32.totalorder %s14, 1
    %p67 = por %p65, %p66
    %p68 = scmp.ne.s32.totalorder %s59, %s60
    %p69 = scmp.eq.s32.totalorder %s14, 0
    %p70 = por %p68, %p69
    %p71 = scmp.ne.s32.totalorder %s59, %s60
    %p72 = scmp.eq.s32.totalorder %s15, 1
    %p73 = por %p71, %p72
    %p75 = scmp.ne.s32.totalorder %s60, %s74
    %p76 = scmp.eq.s32.totalorder %s15, 0
    %p77 = por %p75, %p76
    %s79 = sadd.s32 %s78, 1
    %p82 = scmp.eq.s32.totalorder %s9, 1
    %p83 = scmp.ne.s32.totalorder %s78, %s80
    %p84 = scmp.eq.s32.totalorder %s9, 0
    %p85 = por %p83, %p84
    %p86 = scmp.ne.s32.totalorder %s78, %s80
    %p87 = scmp.eq.s32.totalorder %s14, 1
    %p88 = por %p86, %p87
    %p89 = scmp.ne.s32.totalorder %s80, %s81
    %p90 = scmp.eq.s32.totalorder %s14, 0
    %p91 = por %p89, %p90
    %p92 = scmp.ne.s32.totalorder %s80, %s81
    %p93 = scmp.eq.s32.totalorder %s15, 1
    %p94 = por %p92, %p93
    %p96 = scmp.ne.s32.totalorder %s81, %s95
    %p97 = scmp.eq.s32.totalorder %s15, 0
    %p98 = por %p96, %p97
    %s99 = ssub.s32 %s16, %s28
    %s100 = ssub.s32 %s17, %s24
    %s101 = sor.u32 %s99, %s100
    %p102 = scmp.eq.s32.totalorder %s101, 0
    %s104 = sadd.s32 %s103, 1
    %s105 = scalar_select %p102, %s103, %s104
    %p108 = pneg %p102
    %p109 = scmp.eq.s32.totalorder %s9, 1
    %p110 = por %p108, %p109
    %p111 = scmp.ne.s32.totalorder %s103, %s106
    %p112 = scmp.eq.s32.totalorder %s9, 0
    %p113 = por %p111, %p112
    %p114 = scmp.ne.s32.totalorder %s103, %s106
    %p115 = scmp.eq.s32.totalorder %s14, 1
    %p116 = por %p114, %p115
    %p117 = scmp.ne.s32.totalorder %s106, %s107
    %p118 = scmp.eq.s32.totalorder %s14, 0
    %p119 = por %p117, %p118
    %p120 = scmp.ne.s32.totalorder %s106, %s107
    %p121 = scmp.eq.s32.totalorder %s15, 1
    %p122 = por %p120, %p121
    %p124 = scmp.ne.s32.totalorder %s107, %s123
    %p125 = scmp.eq.s32.totalorder %s15, 0
    %p126 = por %p124, %p125
    %p127 = scmp.le.s32.totalorder 1, %s9
    %p128 = scmp.lt.s32.totalorder %s9, 3
    %p129 = pnand %p127, %p128
    %p130 = pneg %p129
    // Predicated region
    $region9: #{upsampling_deconv_block.1} parent=5 // pred_check
      _
    $region10: #{upsampling_deconv_block.1} parent=5 // pred_check_branch
      %132 = sbr.rel (%p129) target = $region12
    $region11: #{upsampling_deconv_block.1} parent=5 // pred_region
      %s133 = ssub.s32 %s9, 1
      // Predicated region
      $region13: #{upsampling_deconv_block.1} parent=11 // pred_check
        %p134 = pneg %p70
      $region14: #{upsampling_deconv_block.1} parent=11 // pred_check_branch
        %136 = sbr.rel (%p134) target = $region16
      $region15: #{upsampling_deconv_block.1} parent=11 // pred_region
        _
      $region16: #{upsampling_deconv_block.1} parent=11 // pred_fallthru
        _
      // Predicated region
      $region17: #{upsampling_deconv_block.1} parent=11 // pred_check
        %p137 = pneg %p91
      $region18: #{upsampling_deconv_block.1} parent=11 // pred_check_branch
        %139 = sbr.rel (%p137) target = $region20
      $region19: #{upsampling_deconv_block.1} parent=11 // pred_region
        _
      $region20: #{upsampling_deconv_block.1} parent=11 // pred_fallthru
        _
    $region12: #{upsampling_deconv_block.1} parent=5 // pred_fallthru
      _
    %p140 = scmp.lt.s32.totalorder %s9, 2
    // Predicated region
    $region21: #{upsampling_deconv_block.1} parent=5 // pred_check
      %p141 = pneg %p140
    $region22: #{upsampling_deconv_block.1} parent=5 // pred_check_branch
      %143 = sbr.rel (%p141) target = $region24
    $region23: #{upsampling_deconv_block.1} parent=5 // pred_region
      // Predicated region
      $region25: #{upsampling_deconv_block.1} parent=23 // pred_check
        %p144 = pneg %p43
      $region26: #{upsampling_deconv_block.1} parent=23 // pred_check_branch
        %146 = sbr.rel (%p144) target = $region28
      $region27: #{upsampling_deconv_block.1} parent=23 // pred_region
        %s147 = smul.u32 4, %s16
        %s148 = smul.u32 16, %s17
        %p149 = scmp.lt.s32.totalorder %s147, 7
        %s150 = scalar_select %p149, %s147, 7
        %p151 = scmp.lt.s32.totalorder %s148, 15
        %s152 = scalar_select %p151, %s148, 15
        %s153 = smul.addr %s150, 16
        %s154 = sadd.s32 %s152, %s153
        %s155 = smul.addr %s154, 4
        %s156 = scalar_lea.vmem %s0, %s155
        %s157 = smul.u32 4, %s16
        %s158 = smul.u32 16, %s17
      $region28: #{upsampling_deconv_block.1} parent=23 // pred_fallthru
        _
    $region24: #{upsampling_deconv_block.1} parent=5 // pred_fallthru
      _
    %p159 = scmp.le.s32.totalorder 1, %s9
    %p160 = scmp.lt.s32.totalorder %s9, 3
    %p161 = pnand %p159, %p160
    %p162 = pneg %p161
    // Predicated region
    $region29: #{upsampling_deconv_block.1} parent=5 // pred_check
      _
    $region30: #{upsampling_deconv_block.1} parent=5 // pred_check_branch
      %164 = sbr.rel (%p161) target = $region32
    $region31: #{upsampling_deconv_block.1} parent=5 // pred_region
      %s165 = ssub.s32 %s9, 1
      %s166 = smul.u32 4, %s18
      %s167 = smul.u32 16, %s19
      %p168 = scmp.lt.s32.totalorder %s166, 7
      %s169 = scalar_select %p168, %s166, 7
      %p170 = scmp.lt.s32.totalorder %s167, 15
      %s171 = scalar_select %p170, %s167, 15
      %s172 = smul.addr %s169, 16
      %s173 = sadd.s32 %s171, %s172
      %s174 = smul.addr %s173, 4
      %s175 = scalar_lea.vmem %s0, %s174
      %p176 = pneg %p49
      %p177 = pneg %p46
      %p178 = pneg %p70
      %p179 = pneg %p67
      %p180 = pneg %p91
      %p181 = pneg %p88
      %p182 = pneg %p119
      %p183 = pneg %p116
      %s184 = smul.u32 16, %s18
      %s185 = smul.u32 16, %s19
      %p186 = scmp.lt.s32.totalorder %s184, 31
      %s187 = scalar_select %p186, %s184, 31
      %p188 = scmp.lt.s32.totalorder %s185, 15
      %s189 = scalar_select %p188, %s185, 15
      %s190 = smul.addr %s187, 16
      %s191 = sadd.s32 %s189, %s190
      %s192 = smul.addr %s191, 4
      %s193 = scalar_lea.vmem %s3, %s192
      %s194 = smul.u32 4, %s18
      %s195 = smul.u32 16, %s19
      %p196 = scmp.lt.s32.totalorder %s194, 7
      %s197 = scalar_select %p196, %s194, 7
      %p198 = scmp.lt.s32.totalorder %s195, 15
      %s199 = scalar_select %p198, %s195, 15
      %s200 = smul.addr %s197, 16
      %s201 = sadd.s32 %s199, %s200
      %s202 = smul.addr %s201, 4
      %s203 = scalar_lea.vmem %s0, %s202
      %s204 = smul.u32 4, %s18
      %s205 = smul.u32 16, %s19
      %s206 = smul.u32 16, %s18
      %s207 = smul.u32 16, %s19
      %p208 = scmp.lt.s32.totalorder %s206, 31
      %s209 = scalar_select %p208, %s206, 31
      %p210 = scmp.lt.s32.totalorder %s207, 15
      %s211 = scalar_select %p210, %s207, 15
      %s212 = smul.addr %s209, 16
      %s213 = sadd.s32 %s211, %s212
      %s214 = smul.addr %s213, 4
      %s215 = scalar_lea.vmem %s3, %s214
      %s216 = smul.u32 16, %s18
      %s217 = smul.u32 16, %s19
      %v219 = vld [vmem:[%s203] sm:$0xff]
      %v220 = vld [vmem:[%s203 + $0x8] sm:$0xff]
      %v221 = vld [vmem:[%s203 + $0x10] sm:$0xff]
      %v222 = vld [vmem:[%s203 + $0x18] sm:$0xff]
      %v223 = vld [vmem:[%s203 + $0x20] sm:$0xff]
      %v224 = vld [vmem:[%s203 + $0x28] sm:$0xff]
      %v225 = vld [vmem:[%s203 + $0x30] sm:$0xff]
      %v226 = vld [vmem:[%s203 + $0x38] sm:$0xff]
      %v227 = vld [vmem:[%s203 + $0x40] sm:$0xff]
      %v228 = vld [vmem:[%s203 + $0x48] sm:$0xff]
      %v229 = vld [vmem:[%s203 + $0x50] sm:$0xff]
      %v230 = vld [vmem:[%s203 + $0x58] sm:$0xff]
      %v231 = vld [vmem:[%s203 + $0x60] sm:$0xff]
      %v232 = vld [vmem:[%s203 + $0x68] sm:$0xff]
      %v233 = vld [vmem:[%s203 + $0x70] sm:$0xff]
      %v234 = vld [vmem:[%s203 + $0x78] sm:$0xff]
      %v235 = vld [vmem:[%s203 + $0x80] sm:$0xff]
      %v236 = vld [vmem:[%s203 + $0x88] sm:$0xff]
      %v237 = vld [vmem:[%s203 + $0x90] sm:$0xff]
      %v238 = vld [vmem:[%s203 + $0x98] sm:$0xff]
      %v239 = vld [vmem:[%s203 + $0xa0] sm:$0xff]
      %v240 = vld [vmem:[%s203 + $0xa8] sm:$0xff]
      %v241 = vld [vmem:[%s203 + $0xb0] sm:$0xff]
      %v242 = vld [vmem:[%s203 + $0xb8] sm:$0xff]
      %v243 = vld [vmem:[%s203 + $0xc0] sm:$0xff]
      %v244 = vld [vmem:[%s203 + $0xc8] sm:$0xff]
      %v245 = vld [vmem:[%s203 + $0xd0] sm:$0xff]
      %v246 = vld [vmem:[%s203 + $0xd8] sm:$0xff]
      %v247 = vld [vmem:[%s203 + $0xe0] sm:$0xff]
      %v248 = vld [vmem:[%s203 + $0xe8] sm:$0xff]
      %v249 = vld [vmem:[%s203 + $0xf0] sm:$0xff]
      %v250 = vld [vmem:[%s203 + $0xf8] sm:$0xff]
      %v251 = vld [vmem:[%s1] sm:$0xf]
      %v252 = vld [vmem:[%s1 + $0x4] sm:$0xf]
      %v253 = vld [vmem:[%s1 + $0x8] sm:$0xf]
      %v254 = vld [vmem:[%s1 + $0xc] sm:$0xf]
      %v255 = vld [vmem:[%s1 + $0x10] sm:$0xf]
      %v256 = vld [vmem:[%s1 + $0x14] sm:$0xf]
      %v257 = vld [vmem:[%s1 + $0x18] sm:$0xf]
      %v258 = vld [vmem:[%s1 + $0x1c] sm:$0xf]
      %v259 = vld [vmem:[%s1 + $0x20] sm:$0xf]
      %v260 = vld [vmem:[%s1 + $0x24] sm:$0xf]
      %v261 = vld [vmem:[%s1 + $0x28] sm:$0xf]
      %v262 = vld [vmem:[%s1 + $0x2c] sm:$0xf]
      %v263 = vld [vmem:[%s1 + $0x30] sm:$0xf]
      %v264 = vld [vmem:[%s1 + $0x34] sm:$0xf]
      %v265 = vld [vmem:[%s1 + $0x38] sm:$0xf]
      %v266 = vld [vmem:[%s1 + $0x3c] sm:$0xf]
      %v267 = vld [vmem:[%s2] sm:$0xff]
      %v268 = vld [vmem:[%s2 + $0x8] sm:$0xff]
      %v269 = vld [vmem:[%s2 + $0x10] sm:$0xff]
      %v270 = vld [vmem:[%s2 + $0x18] sm:$0xff]
      %v271 = vld [vmem:[%s2 + $0x20] sm:$0xff]
      %v272 = vld [vmem:[%s2 + $0x28] sm:$0xff]
      %v273 = vld [vmem:[%s2 + $0x30] sm:$0xff]
      %v274 = vld [vmem:[%s2 + $0x38] sm:$0xff]
      %v275 = vld [vmem:[%s2 + $0x40] sm:$0xff]
      %v276 = vld [vmem:[%s2 + $0x48] sm:$0xff]
      %v277 = vld [vmem:[%s2 + $0x50] sm:$0xff]
      %v278 = vld [vmem:[%s2 + $0x58] sm:$0xff]
      %v279 = vld [vmem:[%s2 + $0x60] sm:$0xff]
      %v280 = vld [vmem:[%s2 + $0x68] sm:$0xff]
      %v281 = vld [vmem:[%s2 + $0x70] sm:$0xff]
      %v282 = vld [vmem:[%s2 + $0x78] sm:$0xff]
      %284 = vset.pattern.permute.xlu0 0
      %285 = vperm.xlu0 %284, %v267
      %v286 = vpop.permute.xlu0 %285
      %289 = vset.pattern.permute.xlu0 0
      %290 = vperm.xlu0 %289, %v268
      %v291 = vpop.permute.xlu0 %290
      %294 = vset.pattern.permute.xlu0 0
      %295 = vperm.xlu0 %294, %v269
      %v296 = vpop.permute.xlu0 %295
      %299 = vset.pattern.permute.xlu0 0
      %300 = vperm.xlu0 %299, %v270
      %v301 = vpop.permute.xlu0 %300
      %304 = vset.pattern.permute.xlu0 0
      %305 = vperm.xlu0 %304, %v271
      %v306 = vpop.permute.xlu0 %305
      %309 = vset.pattern.permute.xlu0 0
      %310 = vperm.xlu0 %309, %v272
      %v311 = vpop.permute.xlu0 %310
      %314 = vset.pattern.permute.xlu0 0
      %315 = vperm.xlu0 %314, %v273
      %v316 = vpop.permute.xlu0 %315
      %319 = vset.pattern.permute.xlu0 0
      %320 = vperm.xlu0 %319, %v274
      %v321 = vpop.permute.xlu0 %320
      %324 = vset.pattern.permute.xlu0 0
      %325 = vperm.xlu0 %324, %v275
      %v326 = vpop.permute.xlu0 %325
      %329 = vset.pattern.permute.xlu0 0
      %330 = vperm.xlu0 %329, %v276
      %v331 = vpop.permute.xlu0 %330
      %334 = vset.pattern.permute.xlu0 0
      %335 = vperm.xlu0 %334, %v277
      %v336 = vpop.permute.xlu0 %335
      %339 = vset.pattern.permute.xlu0 0
      %340 = vperm.xlu0 %339, %v278
      %v341 = vpop.permute.xlu0 %340
      %344 = vset.pattern.permute.xlu0 0
      %345 = vperm.xlu0 %344, %v279
      %v346 = vpop.permute.xlu0 %345
      %349 = vset.pattern.permute.xlu0 0
      %350 = vperm.xlu0 %349, %v280
      %v351 = vpop.permute.xlu0 %350
      %354 = vset.pattern.permute.xlu0 0
      %355 = vperm.xlu0 %354, %v281
      %v356 = vpop.permute.xlu0 %355
      %359 = vset.pattern.permute.xlu0 0
      %360 = vperm.xlu0 %359, %v282
      %v361 = vpop.permute.xlu0 %360
      %v379 = vunpack.c.l.b16 %v251
      %v380 = vunpack.c.l.b16 %v252
      %v381 = vunpack.c.l.b16 %v253
      %v382 = vunpack.c.l.b16 %v254
      %v383 = vunpack.c.l.b16 %v255
      %v384 = vunpack.c.l.b16 %v256
      %v385 = vunpack.c.l.b16 %v257
      %v386 = vunpack.c.l.b16 %v258
      %v387 = vunpack.c.l.b16 %v259
      %v388 = vunpack.c.l.b16 %v260
      %v389 = vunpack.c.l.b16 %v261
      %v390 = vunpack.c.l.b16 %v262
      %v391 = vunpack.c.l.b16 %v263
      %v392 = vunpack.c.l.b16 %v264
      %v393 = vunpack.c.l.b16 %v265
      %v394 = vunpack.c.l.b16 %v266
      %v395 = vpack.c.b16 %v380, %v379
      %v396 = vpack.c.b16 %v382, %v381
      %v397 = vpack.c.b16 %v384, %v383
      %v398 = vpack.c.b16 %v386, %v385
      %v399 = vpack.c.b16 %v388, %v387
      %v400 = vpack.c.b16 %v390, %v389
      %v401 = vpack.c.b16 %v392, %v391
      %v402 = vpack.c.b16 %v394, %v393
      %v435 = vunpack.c.l.b16 %v219
      %v436 = vunpack.c.h.b16 %v219
      %v437 = vunpack.c.l.b16 %v220
      %v438 = vunpack.c.h.b16 %v220
      %v439 = vunpack.c.l.b16 %v221
      %v440 = vunpack.c.h.b16 %v221
      %v441 = vunpack.c.l.b16 %v222
      %v442 = vunpack.c.h.b16 %v222
      %v443 = vunpack.c.l.b16 %v223
      %v444 = vunpack.c.h.b16 %v223
      %v445 = vunpack.c.l.b16 %v224
      %v446 = vunpack.c.h.b16 %v224
      %v447 = vunpack.c.l.b16 %v225
      %v448 = vunpack.c.h.b16 %v225
      %v449 = vunpack.c.l.b16 %v226
      %v450 = vunpack.c.h.b16 %v226
      %v451 = vunpack.c.l.b16 %v227
      %v452 = vunpack.c.h.b16 %v227
      %v453 = vunpack.c.l.b16 %v228
      %v454 = vunpack.c.h.b16 %v228
      %v455 = vunpack.c.l.b16 %v229
      %v456 = vunpack.c.h.b16 %v229
      %v457 = vunpack.c.l.b16 %v230
      %v458 = vunpack.c.h.b16 %v230
      %v459 = vunpack.c.l.b16 %v231
      %v460 = vunpack.c.h.b16 %v231
      %v461 = vunpack.c.l.b16 %v232
      %v462 = vunpack.c.h.b16 %v232
      %v463 = vunpack.c.l.b16 %v233
      %v464 = vunpack.c.h.b16 %v233
      %v465 = vunpack.c.l.b16 %v234
      %v466 = vunpack.c.h.b16 %v234
      %v467 = vunpack.c.l.b16 %v235
      %v468 = vunpack.c.h.b16 %v235
      %v469 = vunpack.c.l.b16 %v236
      %v470 = vunpack.c.h.b16 %v236
      %v471 = vunpack.c.l.b16 %v237
      %v472 = vunpack.c.h.b16 %v237
      %v473 = vunpack.c.l.b16 %v238
      %v474 = vunpack.c.h.b16 %v238
      %v475 = vunpack.c.l.b16 %v239
      %v476 = vunpack.c.h.b16 %v239
      %v477 = vunpack.c.l.b16 %v240
      %v478 = vunpack.c.h.b16 %v240
      %v479 = vunpack.c.l.b16 %v241
      %v480 = vunpack.c.h.b16 %v241
      %v481 = vunpack.c.l.b16 %v242
      %v482 = vunpack.c.h.b16 %v242
      %v483 = vunpack.c.l.b16 %v243
      %v484 = vunpack.c.h.b16 %v243
      %v485 = vunpack.c.l.b16 %v244
      %v486 = vunpack.c.h.b16 %v244
      %v487 = vunpack.c.l.b16 %v245
      %v488 = vunpack.c.h.b16 %v245
      %v489 = vunpack.c.l.b16 %v246
      %v490 = vunpack.c.h.b16 %v246
      %v491 = vunpack.c.l.b16 %v247
      %v492 = vunpack.c.h.b16 %v247
      %v493 = vunpack.c.l.b16 %v248
      %v494 = vunpack.c.h.b16 %v248
      %v495 = vunpack.c.l.b16 %v249
      %v496 = vunpack.c.h.b16 %v249
      %v497 = vunpack.c.l.b16 %v250
      %v498 = vunpack.c.h.b16 %v250
      %v499 = vpack.c.b16 %v451, %v435
      %v500 = vpack.c.b16 %v452, %v436
      %v501 = vpack.c.b16 %v453, %v437
      %v502 = vpack.c.b16 %v454, %v438
      %v503 = vpack.c.b16 %v455, %v439
      %v504 = vpack.c.b16 %v456, %v440
      %v505 = vpack.c.b16 %v457, %v441
      %v506 = vpack.c.b16 %v458, %v442
      %v507 = vpack.c.b16 %v459, %v443
      %v508 = vpack.c.b16 %v460, %v444
      %v509 = vpack.c.b16 %v461, %v445
      %v510 = vpack.c.b16 %v462, %v446
      %v511 = vpack.c.b16 %v463, %v447
      %v512 = vpack.c.b16 %v464, %v448
      %v513 = vpack.c.b16 %v465, %v449
      %v514 = vpack.c.b16 %v466, %v450
      %v515 = vpack.c.b16 %v483, %v467
      %v516 = vpack.c.b16 %v484, %v468
      %v517 = vpack.c.b16 %v485, %v469
      %v518 = vpack.c.b16 %v486, %v470
      %v519 = vpack.c.b16 %v487, %v471
      %v520 = vpack.c.b16 %v488, %v472
      %v521 = vpack.c.b16 %v489, %v473
      %v522 = vpack.c.b16 %v490, %v474
      %v523 = vpack.c.b16 %v491, %v475
      %v524 = vpack.c.b16 %v492, %v476
      %v525 = vpack.c.b16 %v493, %v477
      %v526 = vpack.c.b16 %v494, %v478
      %v527 = vpack.c.b16 %v495, %v479
      %v528 = vpack.c.b16 %v496, %v480
      %v529 = vpack.c.b16 %v497, %v481
      %v530 = vpack.c.b16 %v498, %v482
      %vm563 = vcmask 261120
      %v565 = vsel %vm563, %v395, 0
      %v568 = vsel %vm563, %v396, 0
      %v571 = vsel %vm563, %v397, 0
      %v574 = vsel %vm563, %v398, 0
      %v577 = vsel %vm563, %v399, 0
      %v580 = vsel %vm563, %v400, 0
      %v583 = vsel %vm563, %v401, 0
      %v586 = vsel %vm563, %v402, 0
      %588 = vmatprep.subr.bf16.mxu0 %v500
      %589 = vmatpush1.bf16.msra.mxu0 %v499
      %590 = vmatprep.subr.bf16.mxu0 %v516
      %591 = vmatpush1.bf16.msra.mxu0 %v515
      %592 = vmatprep.subr.bf16.mxu0 0
      %593 = vmatpush1.bf16.msra.mxu0 0
      %594 = vmatprep.subr.bf16.mxu0 0
      %595 = vmatpush1.bf16.msra.mxu0 0
      %596 = vmatprep.subr.bf16.mxu0 0
      %597 = vmatpush1.bf16.msra.mxu0 0
      %598 = vmatprep.subr.bf16.mxu0 0
      %599 = vmatpush1.bf16.msra.mxu0 0
      %600 = vmatprep.subr.bf16.mxu0 0
      %601 = vmatpush1.bf16.msra.mxu0 0
      %602 = vmatprep.subr.bf16.mxu0 0
      %603 = vmatpush1.bf16.msra.mxu0 0
      %604 = vmatprep.subr.bf16.mxu0 0
      %605 = vmatpush1.bf16.msra.mxu0 0
      %606 = vmatprep.subr.bf16.mxu0 0
      %607 = vmatpush1.bf16.msra.mxu0 0
      %608 = vmatprep.subr.bf16.mxu0 0
      %609 = vmatpush1.bf16.msra.mxu0 0
      %610 = vmatprep.subr.bf16.mxu0 0
      %611 = vmatpush1.bf16.msra.mxu0 0
      %612 = vmatprep.subr.bf16.mxu0 0
      %613 = vmatpush1.bf16.msra.mxu0 0
      %614 = vmatprep.subr.bf16.mxu0 0
      %615 = vmatpush1.bf16.msra.mxu0 0
      %616 = vmatprep.subr.bf16.mxu0 0
      %617 = vmatpush1.bf16.msra.mxu0 0
      %618 = vmatprep.subr.bf16.mxu0 0
      %619 = vmatpush1.bf16.msra.mxu0 0
      %620 = vmatprep.mubr.bf16.mxu0 0
      %621 = vmatmul.mubr.bf16.gmra.mrb[0].mxu0 %v565
      %v622 = vpop.f32.mrb[0].mxu0
      %v623 = vadd.f32 %v286, %v622
      %v624 = vpop.f32.mrb[0].mxu0
      %v625 = vadd.f32 %v286, %v624
      %v626 = vpop.f32.mrb[0].mxu0
      %v627 = vadd.f32 %v291, %v626
      %v628 = vpop.f32.mrb[0].mxu0
      %v629 = vadd.f32 %v291, %v628
      %630 = vmatprep.mubr.bf16.mxu0 0
      %631 = vmatmul.mubr.bf16.gmra.mrb[0].mxu0 %v568
      %v632 = vpop.f32.mrb[0].mxu0
      %v633 = vadd.f32 %v296, %v632
      %v634 = vpop.f32.mrb[0].mxu0
      %v635 = vadd.f32 %v296, %v634
      %v636 = vpop.f32.mrb[0].mxu0
      %v637 = vadd.f32 %v301, %v636
      %v638 = vpop.f32.mrb[0].mxu0
      %v639 = vadd.f32 %v301, %v638
      %640 = vmatprep.mubr.bf16.mxu0 0
      %641 = vmatmul.mubr.bf16.gmra.mrb[0].mxu0 %v571
      %v642 = vpop.f32.mrb[0].mxu0
      %v643 = vadd.f32 %v306, %v642
      %v644 = vpop.f32.mrb[0].mxu0
      %v645 = vadd.f32 %v306, %v644
      %v646 = vpop.f32.mrb[0].mxu0
      %v647 = vadd.f32 %v311, %v646
      %v648 = vpop.f32.mrb[0].mxu0
      %v649 = vadd.f32 %v311, %v648
      %650 = vmatprep.mubr.bf16.mxu0 0
      %651 = vmatmul.mubr.bf16.gmra.mrb[0].mxu0 %v574
      %v652 = vpop.f32.mrb[0].mxu0
      %v653 = vadd.f32 %v316, %v652
      %v654 = vpop.f32.mrb[0].mxu0
      %v655 = vadd.f32 %v316, %v654
      %v656 = vpop.f32.mrb[0].mxu0
      %v657 = vadd.f32 %v321, %v656
      %v658 = vpop.f32.mrb[0].mxu0
      %v659 = vadd.f32 %v321, %v658
      %660 = vmatprep.mubr.bf16.mxu0 0
      %661 = vmatmul.mubr.bf16.gmra.mrb[0].mxu0 %v577
      %v662 = vpop.f32.mrb[0].mxu0
      %v663 = vadd.f32 %v326, %v662
      %v664 = vpop.f32.mrb[0].mxu0
      %v665 = vadd.f32 %v326, %v664
      %v666 = vpop.f32.mrb[0].mxu0
      %v667 = vadd.f32 %v331, %v666
      %v668 = vpop.f32.mrb[0].mxu0
      %v669 = vadd.f32 %v331, %v668
      %670 = vmatprep.mubr.bf16.mxu0 0
      %671 = vmatmul.mubr.bf16.gmra.mrb[0].mxu0 %v580
      %v672 = vpop.f32.mrb[0].mxu0
      %v673 = vadd.f32 %v336, %v672
      %v674 = vpop.f32.mrb[0].mxu0
      %v675 = vadd.f32 %v336, %v674
      %v676 = vpop.f32.mrb[0].mxu0
      %v677 = vadd.f32 %v341, %v676
      %v678 = vpop.f32.mrb[0].mxu0
      %v679 = vadd.f32 %v341, %v678
      %680 = vmatprep.mubr.bf16.mxu0 0
      %681 = vmatmul.mubr.bf16.gmra.mrb[0].mxu0 %v583
      %v682 = vpop.f32.mrb[0].mxu0
      %v683 = vadd.f32 %v346, %v682
      %v684 = vpop.f32.mrb[0].mxu0
      %v685 = vadd.f32 %v346, %v684
      %v686 = vpop.f32.mrb[0].mxu0
      %v687 = vadd.f32 %v351, %v686
      %v688 = vpop.f32.mrb[0].mxu0
      %v689 = vadd.f32 %v351, %v688
      %690 = vmatprep.mubr.bf16.mxu0 0
      %691 = vmatmul.mubr.bf16.gmra.mrb[0].mxu0 %v586
      %v692 = vpop.f32.mrb[0].mxu0
      %v693 = vadd.f32 %v356, %v692
      %v694 = vpop.f32.mrb[0].mxu0
      %v695 = vadd.f32 %v356, %v694
      %v696 = vpop.f32.mrb[0].mxu0
      %v697 = vadd.f32 %v361, %v696
      %v698 = vpop.f32.mrb[0].mxu0
      %v699 = vadd.f32 %v361, %v698
      %700 = vdwg.mxu0
      %701 = vmatprep.subr.bf16.mxu0 %v502
      %702 = vmatpush1.bf16.msra.mxu0 %v501
      %703 = vmatprep.subr.bf16.mxu0 %v518
      %704 = vmatpush1.bf16.msra.mxu0 %v517
      %705 = vmatprep.subr.bf16.mxu0 0
      %706 = vmatpush1.bf16.msra.mxu0 0
      %707 = vmatprep.subr.bf16.mxu0 0
      %708 = vmatpush1.bf16.msra.mxu0 0
      %709 = vmatprep.subr.bf16.mxu0 0
      %710 = vmatpush1.bf16.msra.mxu0 0
      %711 = vmatprep.subr.bf16.mxu0 0
      %712 = vmatpush1.bf16.msra.mxu0 0
      %713 = vmatprep.subr.bf16.mxu0 0
      %714 = vmatpush1.bf16.msra.mxu0 0
      %715 = vmatprep.subr.bf16.mxu0 0
      %716 = vmatpush1.bf16.msra.mxu0 0
      %717 = vmatprep.subr.bf16.mxu0 0
      %718 = vmatpush1.bf16.msra.mxu0 0
      %719 = vmatprep.subr.bf16.mxu0 0
      %720 = vmatpush1.bf16.msra.mxu0 0
      %721 = vmatprep.subr.bf16.mxu0 0
      %722 = vmatpush1.bf16.msra.mxu0 0
      %723 = vmatprep.subr.bf16.mxu0 0
      %724 = vmatpush1.bf16.msra.mxu0 0
      %725 = vmatprep.subr.bf16.mxu0 0
      %726 = vmatpush1.bf16.msra.mxu0 0
      %727 = vmatprep.subr.bf16.mxu0 0
      %728 = vmatpush1.bf16.msra.mxu0 0
      %729 = vmatprep.subr.bf16.mxu0 0
      %730 = vmatpush1.bf16.msra.mxu0 0
      %731 = vmatprep.subr.bf16.mxu0 0
      %732 = vmatpush1.bf16.msra.mxu0 0
      %733 = vmatprep.mubr.bf16.mxu0 0
      %734 = vmatmul.mubr.bf16.gmra.mrb[0].mxu0 %v565
      %v735 = vpop.f32.mrb[0].mxu0
      %v736 = vadd.f32 %v286, %v735
      %v737 = vpop.f32.mrb[0].mxu0
      %v738 = vadd.f32 %v286, %v737
      %v739 = vpop.f32.mrb[0].mxu0
      %v740 = vadd.f32 %v291, %v739
      %v741 = vpop.f32.mrb[0].mxu0
      %v742 = vadd.f32 %v291, %v741
      %743 = vmatprep.mubr.bf16.mxu0 0
      %744 = vmatmul.mubr.bf16.gmra.mrb[0].mxu0 %v568
      %v745 = vpop.f32.mrb[0].mxu0
      %v746 = vadd.f32 %v296, %v745
      %v747 = vpop.f32.mrb[0].mxu0
      %v748 = vadd.f32 %v296, %v747
      %v749 = vpop.f32.mrb[0].mxu0
      %v750 = vadd.f32 %v301, %v749
      %v751 = vpop.f32.mrb[0].mxu0
      %v752 = vadd.f32 %v301, %v751
      %753 = vmatprep.mubr.bf16.mxu0 0
      %754 = vmatmul.mubr.bf16.gmra.mrb[0].mxu0 %v571
      %v755 = vpop.f32.mrb[0].mxu0
      %v756 = vadd.f32 %v306, %v755
      %v757 = vpop.f32.mrb[0].mxu0
      %v758 = vadd.f32 %v306, %v757
      %v759 = vpop.f32.mrb[0].mxu0
      %v760 = vadd.f32 %v311, %v759
      %v761 = vpop.f32.mrb[0].mxu0
      %v762 = vadd.f32 %v311, %v761
      %763 = vmatprep.mubr.bf16.mxu0 0
      %764 = vmatmul.mubr.bf16.gmra.mrb[0].mxu0 %v574
      %v765 = vpop.f32.mrb[0].mxu0
      %v766 = vadd.f32 %v316, %v765
      %v767 = vpop.f32.mrb[0].mxu0
      %v768 = vadd.f32 %v316, %v767
      %v769 = vpop.f32.mrb[0].mxu0
      %v770 = vadd.f32 %v321, %v769
      %v771 = vpop.f32.mrb[0].mxu0
      %v772 = vadd.f32 %v321, %v771
      %773 = vmatprep.mubr.bf16.mxu0 0
      %774 = vmatmul.mubr.bf16.gmra.mrb[0].mxu0 %v577
      %v775 = vpop.f32.mrb[0].mxu0
      %v776 = vadd.f32 %v326, %v775
      %v777 = vpop.f32.mrb[0].mxu0
      %v778 = vadd.f32 %v326, %v777
      %v779 = vpop.f32.mrb[0].mxu0
      %v780 = vadd.f32 %v331, %v779
      %v781 = vpop.f32.mrb[0].mxu0
      %v782 = vadd.f32 %v331, %v781
      %783 = vmatprep.mubr.bf16.mxu0 0
      %784 = vmatmul.mubr.bf16.gmra.mrb[0].mxu0 %v580
      %v785 = vpop.f32.mrb[0].mxu0
      %v786 = vadd.f32 %v336, %v785
      %v787 = vpop.f32.mrb[0].mxu0
      %v788 = vadd.f32 %v336, %v787
      %v789 = vpop.f32.mrb[0].mxu0
      %v790 = vadd.f32 %v341, %v789
      %v791 = vpop.f32.mrb[0].mxu0
      %v792 = vadd.f32 %v341, %v791
      %793 = vmatprep.mubr.bf16.mxu0 0
      %794 = vmatmul.mubr.bf16.gmra.mrb[0].mxu0 %v583
      %v795 = vpop.f32.mrb[0].mxu0
      %v796 = vadd.f32 %v346, %v795
      %v797 = vpop.f32.mrb[0].mxu0
      %v798 = vadd.f32 %v346, %v797
      %v799 = vpop.f32.mrb[0].mxu0
      %v800 = vadd.f32 %v351, %v799
      %v801 = vpop.f32.mrb[0].mxu0
      %v802 = vadd.f32 %v351, %v801
      %803 = vmatprep.mubr.bf16.mxu0 0
      %804 = vmatmul.mubr.bf16.gmra.mrb[0].mxu0 %v586
      %v805 = vpop.f32.mrb[0].mxu0
      %v806 = vadd.f32 %v356, %v805
      %v807 = vpop.f32.mrb[0].mxu0
      %v808 = vadd.f32 %v356, %v807
      %v809 = vpop.f32.mrb[0].mxu0
      %v810 = vadd.f32 %v361, %v809
      %v811 = vpop.f32.mrb[0].mxu0
      %v812 = vadd.f32 %v361, %v811
      %813 = vdwg.mxu0
      %814 = vmatprep.subr.bf16.mxu0 %v504
      %815 = vmatpush1.bf16.msra.mxu0 %v503
      %816 = vmatprep.subr.bf16.mxu0 %v520
      %817 = vmatpush1.bf16.msra.mxu0 %v519
      %818 = vmatprep.subr.bf16.mxu0 0
      %819 = vmatpush1.bf16.msra.mxu0 0
      %820 = vmatprep.subr.bf16.mxu0 0
      %821 = vmatpush1.bf16.msra.mxu0 0
      %822 = vmatprep.subr.bf16.mxu0 0
      %823 = vmatpush1.bf16.msra.mxu0 0
      %824 = vmatprep.subr.bf16.mxu0 0
      %825 = vmatpush1.bf16.msra.mxu0 0
      %826 = vmatprep.subr.bf16.mxu0 0
      %827 = vmatpush1.bf16.msra.mxu0 0
      %828 = vmatprep.subr.bf16.mxu0 0
      %829 = vmatpush1.bf16.msra.mxu0 0
      %830 = vmatprep.subr.bf16.mxu0 0
      %831 = vmatpush1.bf16.msra.mxu0 0
      %832 = vmatprep.subr.bf16.mxu0 0
      %833 = vmatpush1.bf16.msra.mxu0 0
      %834 = vmatprep.subr.bf16.mxu0 0
      %835 = vmatpush1.bf16.msra.mxu0 0
      %836 = vmatprep.subr.bf16.mxu0 0
      %837 = vmatpush1.bf16.msra.mxu0 0
      %838 = vmatprep.subr.bf16.mxu0 0
      %839 = vmatpush1.bf16.msra.mxu0 0
      %840 = vmatprep.subr.bf16.mxu0 0
      %841 = vmatpush1.bf16.msra.mxu0 0
      %842 = vmatprep.subr.bf16.mxu0 0
      %843 = vmatpush1.bf16.msra.mxu0 0
      %844 = vmatprep.subr.bf16.mxu0 0
      %845 = vmatpush1.bf16.msra.mxu0 0
      %846 = vmatprep.mubr.bf16.mxu0 0
      %847 = vmatmul.mubr.bf16.gmra.mrb[0].mxu0 %v565
      %v848 = vpop.f32.mrb[0].mxu0
      %v849 = vadd.f32 %v286, %v848
      %v850 = vpop.f32.mrb[0].mxu0
      %v851 = vadd.f32 %v286, %v850
      %v852 = vpop.f32.mrb[0].mxu0
      %v853 = vadd.f32 %v291, %v852
      %v854 = vpop.f32.mrb[0].mxu0
      %v855 = vadd.f32 %v291, %v854
      %856 = vmatprep.mubr.bf16.mxu0 0
      %857 = vmatmul.mubr.bf16.gmra.mrb[0].mxu0 %v568
      %v858 = vpop.f32.mrb[0].mxu0
      %v859 = vadd.f32 %v296, %v858
      %v860 = vpop.f32.mrb[0].mxu0
      %v861 = vadd.f32 %v296, %v860
      %v862 = vpop.f32.mrb[0].mxu0
      %v863 = vadd.f32 %v301, %v862
      %v864 = vpop.f32.mrb[0].mxu0
      %v865 = vadd.f32 %v301, %v864
      %866 = vmatprep.mubr.bf16.mxu0 0
      %867 = vmatmul.mubr.bf16.gmra.mrb[0].mxu0 %v571
      %v868 = vpop.f32.mrb[0].mxu0
      %v869 = vadd.f32 %v306, %v868
      %v870 = vpop.f32.mrb[0].mxu0
      %v871 = vadd.f32 %v306, %v870
      %v872 = vpop.f32.mrb[0].mxu0
      %v873 = vadd.f32 %v311, %v872
      %v874 = vpop.f32.mrb[0].mxu0
      %v875 = vadd.f32 %v311, %v874
      %876 = vmatprep.mubr.bf16.mxu0 0
      %877 = vmatmul.mubr.bf16.gmra.mrb[0].mxu0 %v574
      %v878 = vpop.f32.mrb[0].mxu0
      %v879 = vadd.f32 %v316, %v878
      %v880 = vpop.f32.mrb[0].mxu0
      %v881 = vadd.f32 %v316, %v880
      %v882 = vpop.f32.mrb[0].mxu0
      %v883 = vadd.f32 %v321, %v882
      %v884 = vpop.f32.mrb[0].mxu0
      %v885 = vadd.f32 %v321, %v884
      %886 = vmatprep.mubr.bf16.mxu0 0
      %887 = vmatmul.mubr.bf16.gmra.mrb[0].mxu0 %v577
      %v888 = vpop.f32.mrb[0].mxu0
      %v889 = vadd.f32 %v326, %v888
      %v890 = vpop.f32.mrb[0].mxu0
      %v891 = vadd.f32 %v326, %v890
      %v892 = vpop.f32.mrb[0].mxu0
      %v893 = vadd.f32 %v331, %v892
      %v894 = vpop.f32.mrb[0].mxu0
      %v895 = vadd.f32 %v331, %v894
      %896 = vmatprep.mubr.bf16.mxu0 0
      %897 = vmatmul.mubr.bf16.gmra.mrb[0].mxu0 %v580
      %v898 = vpop.f32.mrb[0].mxu0
      %v899 = vadd.f32 %v336, %v898
      %v900 = vpop.f32.mrb[0].mxu0
      %v901 = vadd.f32 %v336, %v900
      %v902 = vpop.f32.mrb[0].mxu0
      %v903 = vadd.f32 %v341, %v902
      %v904 = vpop.f32.mrb[0].mxu0
      %v905 = vadd.f32 %v341, %v904
      %906 = vmatprep.mubr.bf16.mxu0 0
      %907 = vmatmul.mubr.bf16.gmra.mrb[0].mxu0 %v583
      %v908 = vpop.f32.mrb[0].mxu0
      %v909 = vadd.f32 %v346, %v908
      %v910 = vpop.f32.mrb[0].mxu0
      %v911 = vadd.f32 %v346, %v910
      %v912 = vpop.f32.mrb[0].mxu0
      %v913 = vadd.f32 %v351, %v912
      %v914 = vpop.f32.mrb[0].mxu0
      %v915 = vadd.f32 %v351, %v914
      %916 = vmatprep.mubr.bf16.mxu0 0
      %917 = vmatmul.mubr.bf16.gmra.mrb[0].mxu0 %v586
      %v918 = vpop.f32.mrb[0].mxu0
      %v919 = vadd.f32 %v356, %v918
      %v920 = vpop.f32.mrb[0].mxu0
      %v921 = vadd.f32 %v356, %v920
      %v922 = vpop.f32.mrb[0].mxu0
      %v923 = vadd.f32 %v361, %v922
      %v924 = vpop.f32.mrb[0].mxu0
      %v925 = vadd.f32 %v361, %v924
      %926 = vdwg.mxu0
      %927 = vmatprep.subr.bf16.mxu0 %v506
      %928 = vmatpush1.bf16.msra.mxu0 %v505
      %929 = vmatprep.subr.bf16.mxu0 %v522
      %930 = vmatpush1.bf16.msra.mxu0 %v521
      %931 = vmatprep.subr.bf16.mxu0 0
      %932 = vmatpush1.bf16.msra.mxu0 0
      %933 = vmatprep.subr.bf16.mxu0 0
      %934 = vmatpush1.bf16.msra.mxu0 0
      %935 = vmatprep.subr.bf16.mxu0 0
      %936 = vmatpush1.bf16.msra.mxu0 0
      %937 = vmatprep.subr.bf16.mxu0 0
      %938 = vmatpush1.bf16.msra.mxu0 0
      %939 = vmatprep.subr.bf16.mxu0 0
      %940 = vmatpush1.bf16.msra.mxu0 0
      %941 = vmatprep.subr.bf16.mxu0 0
      %942 = vmatpush1.bf16.msra.mxu0 0
      %943 = vmatprep.subr.bf16.mxu0 0
      %944 = vmatpush1.bf16.msra.mxu0 0
      %945 = vmatprep.subr.bf16.mxu0 0
      %946 = vmatpush1.bf16.msra.mxu0 0
      %947 = vmatprep.subr.bf16.mxu0 0
      %948 = vmatpush1.bf16.msra.mxu0 0
      %949 = vmatprep.subr.bf16.mxu0 0
      %950 = vmatpush1.bf16.msra.mxu0 0
      %951 = vmatprep.subr.bf16.mxu0 0
      %952 = vmatpush1.bf16.msra.mxu0 0
      %953 = vmatprep.subr.bf16.mxu0 0
      %954 = vmatpush1.bf16.msra.mxu0 0
      %955 = vmatprep.subr.bf16.mxu0 0
      %956 = vmatpush1.bf16.msra.mxu0 0
      %957 = vmatprep.subr.bf16.mxu0 0
      %958 = vmatpush1.bf16.msra.mxu0 0
      %959 = vmatprep.mubr.bf16.mxu0 0
      %960 = vmatmul.mubr.bf16.gmra.mrb[0].mxu0 %v565
      %v961 = vpop.f32.mrb[0].mxu0
      %v962 = vadd.f32 %v286, %v961
      %v963 = vpop.f32.mrb[0].mxu0
      %v964 = vadd.f32 %v286, %v963
      %v965 = vpop.f32.mrb[0].mxu0
      %v966 = vadd.f32 %v291, %v965
      %v967 = vpop.f32.mrb[0].mxu0
      %v968 = vadd.f32 %v291, %v967
      %969 = vmatprep.mubr.bf16.mxu0 0
      %970 = vmatmul.mubr.bf16.gmra.mrb[0].mxu0 %v568
      %v971 = vpop.f32.mrb[0].mxu0
      %v972 = vadd.f32 %v296, %v971
      %v973 = vpop.f32.mrb[0].mxu0
      %v974 = vadd.f32 %v296, %v973
      %v975 = vpop.f32.mrb[0].mxu0
      %v976 = vadd.f32 %v301, %v975
      %v977 = vpop.f32.mrb[0].mxu0
      %v978 = vadd.f32 %v301, %v977
      %979 = vmatprep.mubr.bf16.mxu0 0
      %980 = vmatmul.mubr.bf16.gmra.mrb[0].mxu0 %v571
      %v981 = vpop.f32.mrb[0].mxu0
      %v982 = vadd.f32 %v306, %v981
      %v983 = vpop.f32.mrb[0].mxu0
      %v984 = vadd.f32 %v306, %v983
      %v985 = vpop.f32.mrb[0].mxu0
      %v986 = vadd.f32 %v311, %v985
      %v987 = vpop.f32.mrb[0].mxu0
      %v988 = vadd.f32 %v311, %v987
      %989 = vmatprep.mubr.bf16.mxu0 0
      %990 = vmatmul.mubr.bf16.gmra.mrb[0].mxu0 %v574
      %v991 = vpop.f32.mrb[0].mxu0
      %v992 = vadd.f32 %v316, %v991
      %v993 = vpop.f32.mrb[0].mxu0
      %v994 = vadd.f32 %v316, %v993
      %v995 = vpop.f32.mrb[0].mxu0
      %v996 = vadd.f32 %v321, %v995
      %v997 = vpop.f32.mrb[0].mxu0
      %v998 = vadd.f32 %v321, %v997
      %999 = vmatprep.mubr.bf16.mxu0 0
      %1000 = vmatmul.mubr.bf16.gmra.mrb[0].mxu0 %v577
      %v1001 = vpop.f32.mrb[0].mxu0
      %v1002 = vadd.f32 %v326, %v1001
      %v1003 = vpop.f32.mrb[0].mxu0
      %v1004 = vadd.f32 %v326, %v1003
      %v1005 = vpop.f32.mrb[0].mxu0
      %v1006 = vadd.f32 %v331, %v1005
      %v1007 = vpop.f32.mrb[0].mxu0
      %v1008 = vadd.f32 %v331, %v1007
      %1009 = vmatprep.mubr.bf16.mxu0 0
      %1010 = vmatmul.mubr.bf16.gmra.mrb[0].mxu0 %v580
      %v1011 = vpop.f32.mrb[0].mxu0
      %v1012 = vadd.f32 %v336, %v1011
      %v1013 = vpop.f32.mrb[0].mxu0
      %v1014 = vadd.f32 %v336, %v1013
      %v1015 = vpop.f32.mrb[0].mxu0
      %v1016 = vadd.f32 %v341, %v1015
      %v1017 = vpop.f32.mrb[0].mxu0
      %v1018 = vadd.f32 %v341, %v1017
      %1019 = vmatprep.mubr.bf16.mxu0 0
      %1020 = vmatmul.mubr.bf16.gmra.mrb[0].mxu0 %v583
      %v1021 = vpop.f32.mrb[0].mxu0
      %v1022 = vadd.f32 %v346, %v1021
      %v1023 = vpop.f32.mrb[0].mxu0
      %v1024 = vadd.f32 %v346, %v1023
      %v1025 = vpop.f32.mrb[0].mxu0
      %v1026 = vadd.f32 %v351, %v1025
      %v1027 = vpop.f32.mrb[0].mxu0
      %v1028 = vadd.f32 %v351, %v1027
      %1029 = vmatprep.mubr.bf16.mxu0 0
      %1030 = vmatmul.mubr.bf16.gmra.mrb[0].mxu0 %v586
      %v1031 = vpop.f32.mrb[0].mxu0
      %v1032 = vadd.f32 %v356, %v1031
      %v1033 = vpop.f32.mrb[0].mxu0
      %v1034 = vadd.f32 %v356, %v1033
      %v1035 = vpop.f32.mrb[0].mxu0
      %v1036 = vadd.f32 %v361, %v1035
      %v1037 = vpop.f32.mrb[0].mxu0
      %v1038 = vadd.f32 %v361, %v1037
      %1039 = vdwg.mxu0
      %1040 = vmatprep.subr.bf16.mxu0 %v508
      %1041 = vmatpush1.bf16.msra.mxu0 %v507
      %1042 = vmatprep.subr.bf16.mxu0 %v524
      %1043 = vmatpush1.bf16.msra.mxu0 %v523
      %1044 = vmatprep.subr.bf16.mxu0 0
      %1045 = vmatpush1.bf16.msra.mxu0 0
      %1046 = vmatprep.subr.bf16.mxu0 0
      %1047 = vmatpush1.bf16.msra.mxu0 0
      %1048 = vmatprep.subr.bf16.mxu0 0
      %1049 = vmatpush1.bf16.msra.mxu0 0
      %1050 = vmatprep.subr.bf16.mxu0 0
      %1051 = vmatpush1.bf16.msra.mxu0 0
      %1052 = vmatprep.subr.bf16.mxu0 0
      %1053 = vmatpush1.bf16.msra.mxu0 0
      %1054 = vmatprep.subr.bf16.mxu0 0
      %1055 = vmatpush1.bf16.msra.mxu0 0
      %1056 = vmatprep.subr.bf16.mxu0 0
      %1057 = vmatpush1.bf16.msra.mxu0 0
      %1058 = vmatprep.subr.bf16.mxu0 0
      %1059 = vmatpush1.bf16.msra.mxu0 0
      %1060 = vmatprep.subr.bf16.mxu0 0
      %1061 = vmatpush1.bf16.msra.mxu0 0
      %1062 = vmatprep.subr.bf16.mxu0 0
      %1063 = vmatpush1.bf16.msra.mxu0 0
      %1064 = vmatprep.subr.bf16.mxu0 0
      %1065 = vmatpush1.bf16.msra.mxu0 0
      %1066 = vmatprep.subr.bf16.mxu0 0
      %1067 = vmatpush1.bf16.msra.mxu0 0
      %1068 = vmatprep.subr.bf16.mxu0 0
      %1069 = vmatpush1.bf16.msra.mxu0 0
      %1070 = vmatprep.subr.bf16.mxu0 0
      %1071 = vmatpush1.bf16.msra.mxu0 0
      %1072 = vmatprep.mubr.bf16.mxu0 0
      %1073 = vmatmul.mubr.bf16.gmra.mrb[0].mxu0 %v565
      %v1074 = vpop.f32.mrb[0].mxu0
      %v1075 = vadd.f32 %v286, %v1074
      %v1076 = vpop.f32.mrb[0].mxu0
      %v1077 = vadd.f32 %v286, %v1076
      %v1078 = vpop.f32.mrb[0].mxu0
      %v1079 = vadd.f32 %v291, %v1078
      %v1080 = vpop.f32.mrb[0].mxu0
      %v1081 = vadd.f32 %v291, %v1080
      %1082 = vmatprep.mubr.bf16.mxu0 0
      %1083 = vmatmul.mubr.bf16.gmra.mrb[0].mxu0 %v568
      %v1084 = vpop.f32.mrb[0].mxu0
      %v1085 = vadd.f32 %v296, %v1084
      %v1086 = vpop.f32.mrb[0].mxu0
      %v1087 = vadd.f32 %v296, %v1086
      %v1088 = vpop.f32.mrb[0].mxu0
      %v1089 = vadd.f32 %v301, %v1088
      %v1090 = vpop.f32.mrb[0].mxu0
      %v1091 = vadd.f32 %v301, %v1090
      %1092 = vmatprep.mubr.bf16.mxu0 0
      %1093 = vmatmul.mubr.bf16.gmra.mrb[0].mxu0 %v571
      %v1094 = vpop.f32.mrb[0].mxu0
      %v1095 = vadd.f32 %v306, %v1094
      %v1096 = vpop.f32.mrb[0].mxu0
      %v1097 = vadd.f32 %v306, %v1096
      %v1098 = vpop.f32.mrb[0].mxu0
      %v1099 = vadd.f32 %v311, %v1098
      %v1100 = vpop.f32.mrb[0].mxu0
      %v1101 = vadd.f32 %v311, %v1100
      %1102 = vmatprep.mubr.bf16.mxu0 0
      %1103 = vmatmul.mubr.bf16.gmra.mrb[0].mxu0 %v574
      %v1104 = vpop.f32.mrb[0].mxu0
      %v1105 = vadd.f32 %v316, %v1104
      %v1106 = vpop.f32.mrb[0].mxu0
      %v1107 = vadd.f32 %v316, %v1106
      %v1108 = vpop.f32.mrb[0].mxu0
      %v1109 = vadd.f32 %v321, %v1108
      %v1110 = vpop.f32.mrb[0].mxu0
      %v1111 = vadd.f32 %v321, %v1110
      %1112 = vmatprep.mubr.bf16.mxu0 0
      %1113 = vmatmul.mubr.bf16.gmra.mrb[0].mxu0 %v577
      %v1114 = vpop.f32.mrb[0].mxu0
      %v1115 = vadd.f32 %v326, %v1114
      %v1116 = vpop.f32.mrb[0].mxu0
      %v1117 = vadd.f32 %v326, %v1116
      %v1118 = vpop.f32.mrb[0].mxu0
      %v1119 = vadd.f32 %v331, %v1118
      %v1120 = vpop.f32.mrb[0].mxu0
      %v1121 = vadd.f32 %v331, %v1120
      %1122 = vmatprep.mubr.bf16.mxu0 0
      %1123 = vmatmul.mubr.bf16.gmra.mrb[0].mxu0 %v580
      %v1124 = vpop.f32.mrb[0].mxu0
      %v1125 = vadd.f32 %v336, %v1124
      %v1126 = vpop.f32.mrb[0].mxu0
      %v1127 = vadd.f32 %v336, %v1126
      %v1128 = vpop.f32.mrb[0].mxu0
      %v1129 = vadd.f32 %v341, %v1128
      %v1130 = vpop.f32.mrb[0].mxu0
      %v1131 = vadd.f32 %v341, %v1130
      %1132 = vmatprep.mubr.bf16.mxu0 0
      %1133 = vmatmul.mubr.bf16.gmra.mrb[0].mxu0 %v583
      %v1134 = vpop.f32.mrb[0].mxu0
      %v1135 = vadd.f32 %v346, %v1134
      %v1136 = vpop.f32.mrb[0].mxu0
      %v1137 = vadd.f32 %v346, %v1136
      %v1138 = vpop.f32.mrb[0].mxu0
      %v1139 = vadd.f32 %v351, %v1138
      %v1140 = vpop.f32.mrb[0].mxu0
      %v1141 = vadd.f32 %v351, %v1140
      %1142 = vmatprep.mubr.bf16.mxu0 0
      %1143 = vmatmul.mubr.bf16.gmra.mrb[0].mxu0 %v586
      %v1144 = vpop.f32.mrb[0].mxu0
      %v1145 = vadd.f32 %v356, %v1144
      %v1146 = vpop.f32.mrb[0].mxu0
      %v1147 = vadd.f32 %v356, %v1146
      %v1148 = vpop.f32.mrb[0].mxu0
      %v1149 = vadd.f32 %v361, %v1148
      %v1150 = vpop.f32.mrb[0].mxu0
      %v1151 = vadd.f32 %v361, %v1150
      %1152 = vdwg.mxu0
      %1153 = vmatprep.subr.bf16.mxu0 %v510
      %1154 = vmatpush1.bf16.msra.mxu0 %v509
      %1155 = vmatprep.subr.bf16.mxu0 %v526
      %1156 = vmatpush1.bf16.msra.mxu0 %v525
      %1157 = vmatprep.subr.bf16.mxu0 0
      %1158 = vmatpush1.bf16.msra.mxu0 0
      %1159 = vmatprep.subr.bf16.mxu0 0
      %1160 = vmatpush1.bf16.msra.mxu0 0
      %1161 = vmatprep.subr.bf16.mxu0 0
      %1162 = vmatpush1.bf16.msra.mxu0 0
      %1163 = vmatprep.subr.bf16.mxu0 0
      %1164 = vmatpush1.bf16.msra.mxu0 0
      %1165 = vmatprep.subr.bf16.mxu0 0
      %1166 = vmatpush1.bf16.msra.mxu0 0
      %1167 = vmatprep.subr.bf16.mxu0 0
      %1168 = vmatpush1.bf16.msra.mxu0 0
      %1169 = vmatprep.subr.bf16.mxu0 0
      %1170 = vmatpush1.bf16.msra.mxu0 0
      %1171 = vmatprep.subr.bf16.mxu0 0
      %1172 = vmatpush1.bf16.msra.mxu0 0
      %1173 = vmatprep.subr.bf16.mxu0 0
      %1174 = vmatpush1.bf16.msra.mxu0 0
      %1175 = vmatprep.subr.bf16.mxu0 0
      %1176 = vmatpush1.bf16.msra.mxu0 0
      %1177 = vmatprep.subr.bf16.mxu0 0
      %1178 = vmatpush1.bf16.msra.mxu0 0
      %1179 = vmatprep.subr.bf16.mxu0 0
      %1180 = vmatpush1.bf16.msra.mxu0 0
      %1181 = vmatprep.subr.bf16.mxu0 0
      %1182 = vmatpush1.bf16.msra.mxu0 0
      %1183 = vmatprep.subr.bf16.mxu0 0
      %1184 = vmatpush1.bf16.msra.mxu0 0
      %1185 = vmatprep.mubr.bf16.mxu0 0
      %1186 = vmatmul.mubr.bf16.gmra.mrb[0].mxu0 %v565
      %v1187 = vpop.f32.mrb[0].mxu0
      %v1188 = vadd.f32 %v286, %v1187
      %v1189 = vpop.f32.mrb[0].mxu0
      %v1190 = vadd.f32 %v286, %v1189
      %v1191 = vpop.f32.mrb[0].mxu0
      %v1192 = vadd.f32 %v291, %v1191
      %v1193 = vpop.f32.mrb[0].mxu0
      %v1194 = vadd.f32 %v291, %v1193
      %1195 = vmatprep.mubr.bf16.mxu0 0
      %1196 = vmatmul.mubr.bf16.gmra.mrb[0].mxu0 %v568
      %v1197 = vpop.f32.mrb[0].mxu0
      %v1198 = vadd.f32 %v296, %v1197
      %v1199 = vpop.f32.mrb[0].mxu0
      %v1200 = vadd.f32 %v296, %v1199
      %v1201 = vpop.f32.mrb[0].mxu0
      %v1202 = vadd.f32 %v301, %v1201
      %v1203 = vpop.f32.mrb[0].mxu0
      %v1204 = vadd.f32 %v301, %v1203
      %1205 = vmatprep.mubr.bf16.mxu0 0
      %1206 = vmatmul.mubr.bf16.gmra.mrb[0].mxu0 %v571
      %v1207 = vpop.f32.mrb[0].mxu0
      %v1208 = vadd.f32 %v306, %v1207
      %v1209 = vpop.f32.mrb[0].mxu0
      %v1210 = vadd.f32 %v306, %v1209
      %v1211 = vpop.f32.mrb[0].mxu0
      %v1212 = vadd.f32 %v311, %v1211
      %v1213 = vpop.f32.mrb[0].mxu0
      %v1214 = vadd.f32 %v311, %v1213
      %1215 = vmatprep.mubr.bf16.mxu0 0
      %1216 = vmatmul.mubr.bf16.gmra.mrb[0].mxu0 %v574
      %v1217 = vpop.f32.mrb[0].mxu0
      %v1218 = vadd.f32 %v316, %v1217
      %v1219 = vpop.f32.mrb[0].mxu0
      %v1220 = vadd.f32 %v316, %v1219
      %v1221 = vpop.f32.mrb[0].mxu0
      %v1222 = vadd.f32 %v321, %v1221
      %v1223 = vpop.f32.mrb[0].mxu0
      %v1224 = vadd.f32 %v321, %v1223
      %1225 = vmatprep.mubr.bf16.mxu0 0
      %1226 = vmatmul.mubr.bf16.gmra.mrb[0].mxu0 %v577
      %v1227 = vpop.f32.mrb[0].mxu0
      %v1228 = vadd.f32 %v326, %v1227
      %v1229 = vpop.f32.mrb[0].mxu0
      %v1230 = vadd.f32 %v326, %v1229
      %v1231 = vpop.f32.mrb[0].mxu0
      %v1232 = vadd.f32 %v331, %v1231
      %v1233 = vpop.f32.mrb[0].mxu0
      %v1234 = vadd.f32 %v331, %v1233
      %1235 = vmatprep.mubr.bf16.mxu0 0
      %1236 = vmatmul.mubr.bf16.gmra.mrb[0].mxu0 %v580
      %v1237 = vpop.f32.mrb[0].mxu0
      %v1238 = vadd.f32 %v336, %v1237
      %v1239 = vpop.f32.mrb[0].mxu0
      %v1240 = vadd.f32 %v336, %v1239
      %v1241 = vpop.f32.mrb[0].mxu0
      %v1242 = vadd.f32 %v341, %v1241
      %v1243 = vpop.f32.mrb[0].mxu0
      %v1244 = vadd.f32 %v341, %v1243
      %1245 = vmatprep.mubr.bf16.mxu0 0
      %1246 = vmatmul.mubr.bf16.gmra.mrb[0].mxu0 %v583
      %v1247 = vpop.f32.mrb[0].mxu0
      %v1248 = vadd.f32 %v346, %v1247
      %v1249 = vpop.f32.mrb[0].mxu0
      %v1250 = vadd.f32 %v346, %v1249
      %v1251 = vpop.f32.mrb[0].mxu0
      %v1252 = vadd.f32 %v351, %v1251
      %v1253 = vpop.f32.mrb[0].mxu0
      %v1254 = vadd.f32 %v351, %v1253
      %1255 = vmatprep.mubr.bf16.mxu0 0
      %1256 = vmatmul.mubr.bf16.gmra.mrb[0].mxu0 %v586
      %v1257 = vpop.f32.mrb[0].mxu0
      %v1258 = vadd.f32 %v356, %v1257
      %v1259 = vpop.f32.mrb[0].mxu0
      %v1260 = vadd.f32 %v356, %v1259
      %v1261 = vpop.f32.mrb[0].mxu0
      %v1262 = vadd.f32 %v361, %v1261
      %v1263 = vpop.f32.mrb[0].mxu0
      %v1264 = vadd.f32 %v361, %v1263
      %1265 = vdwg.mxu0
      %1266 = vmatprep.subr.bf16.mxu0 %v512
      %1267 = vmatpush1.bf16.msra.mxu0 %v511
      %1268 = vmatprep.subr.bf16.mxu0 %v528
      %1269 = vmatpush1.bf16.msra.mxu0 %v527
      %1270 = vmatprep.subr.bf16.mxu0 0
      %1271 = vmatpush1.bf16.msra.mxu0 0
      %1272 = vmatprep.subr.bf16.mxu0 0
      %1273 = vmatpush1.bf16.msra.mxu0 0
      %1274 = vmatprep.subr.bf16.mxu0 0
      %1275 = vmatpush1.bf16.msra.mxu0 0
      %1276 = vmatprep.subr.bf16.mxu0 0
      %1277 = vmatpush1.bf16.msra.mxu0 0
      %1278 = vmatprep.subr.bf16.mxu0 0
      %1279 = vmatpush1.bf16.msra.mxu0 0
      %1280 = vmatprep.subr.bf16.mxu0 0
      %1281 = vmatpush1.bf16.msra.mxu0 0
      %1282 = vmatprep.subr.bf16.mxu0 0
      %1283 = vmatpush1.bf16.msra.mxu0 0
      %1284 = vmatprep.subr.bf16.mxu0 0
      %1285 = vmatpush1.bf16.msra.mxu0 0
      %1286 = vmatprep.subr.bf16.mxu0 0
      %1287 = vmatpush1.bf16.msra.mxu0 0
      %1288 = vmatprep.subr.bf16.mxu0 0
      %1289 = vmatpush1.bf16.msra.mxu0 0
      %1290 = vmatprep.subr.bf16.mxu0 0
      %1291 = vmatpush1.bf16.msra.mxu0 0
      %1292 = vmatprep.subr.bf16.mxu0 0
      %1293 = vmatpush1.bf16.msra.mxu0 0
      %1294 = vmatprep.subr.bf16.mxu0 0
      %1295 = vmatpush1.bf16.msra.mxu0 0
      %1296 = vmatprep.subr.bf16.mxu0 0
      %1297 = vmatpush1.bf16.msra.mxu0 0
      %1298 = vmatprep.mubr.bf16.mxu0 0
      %1299 = vmatmul.mubr.bf16.gmra.mrb[0].mxu0 %v565
      %v1300 = vpop.f32.mrb[0].mxu0
      %v1301 = vadd.f32 %v286, %v1300
      %v1302 = vpop.f32.mrb[0].mxu0
      %v1303 = vadd.f32 %v286, %v1302
      %v1304 = vpop.f32.mrb[0].mxu0
      %v1305 = vadd.f32 %v291, %v1304
      %v1306 = vpop.f32.mrb[0].mxu0
      %v1307 = vadd.f32 %v291, %v1306
      %1308 = vmatprep.mubr.bf16.mxu0 0
      %1309 = vmatmul.mubr.bf16.gmra.mrb[0].mxu0 %v568
      %v1310 = vpop.f32.mrb[0].mxu0
      %v1311 = vadd.f32 %v296, %v1310
      %v1312 = vpop.f32.mrb[0].mxu0
      %v1313 = vadd.f32 %v296, %v1312
      %v1314 = vpop.f32.mrb[0].mxu0
      %v1315 = vadd.f32 %v301, %v1314
      %v1316 = vpop.f32.mrb[0].mxu0
      %v1317 = vadd.f32 %v301, %v1316
      %1318 = vmatprep.mubr.bf16.mxu0 0
      %1319 = vmatmul.mubr.bf16.gmra.mrb[0].mxu0 %v571
      %v1320 = vpop.f32.mrb[0].mxu0
      %v1321 = vadd.f32 %v306, %v1320
      %v1322 = vpop.f32.mrb[0].mxu0
      %v1323 = vadd.f32 %v306, %v1322
      %v1324 = vpop.f32.mrb[0].mxu0
      %v1325 = vadd.f32 %v311, %v1324
      %v1326 = vpop.f32.mrb[0].mxu0
      %v1327 = vadd.f32 %v311, %v1326
      %1328 = vmatprep.mubr.bf16.mxu0 0
      %1329 = vmatmul.mubr.bf16.gmra.mrb[0].mxu0 %v574
      %v1330 = vpop.f32.mrb[0].mxu0
      %v1331 = vadd.f32 %v316, %v1330
      %v1332 = vpop.f32.mrb[0].mxu0
      %v1333 = vadd.f32 %v316, %v1332
      %v1334 = vpop.f32.mrb[0].mxu0
      %v1335 = vadd.f32 %v321, %v1334
      %v1336 = vpop.f32.mrb[0].mxu0
      %v1337 = vadd.f32 %v321, %v1336
      %1338 = vmatprep.mubr.bf16.mxu0 0
      %1339 = vmatmul.mubr.bf16.gmra.mrb[0].mxu0 %v577
      %v1340 = vpop.f32.mrb[0].mxu0
      %v1341 = vadd.f32 %v326, %v1340
      %v1342 = vpop.f32.mrb[0].mxu0
      %v1343 = vadd.f32 %v326, %v1342
      %v1344 = vpop.f32.mrb[0].mxu0
      %v1345 = vadd.f32 %v331, %v1344
      %v1346 = vpop.f32.mrb[0].mxu0
      %v1347 = vadd.f32 %v331, %v1346
      %1348 = vmatprep.mubr.bf16.mxu0 0
      %1349 = vmatmul.mubr.bf16.gmra.mrb[0].mxu0 %v580
      %v1350 = vpop.f32.mrb[0].mxu0
      %v1351 = vadd.f32 %v336, %v1350
      %v1352 = vpop.f32.mrb[0].mxu0
      %v1353 = vadd.f32 %v336, %v1352
      %v1354 = vpop.f32.mrb[0].mxu0
      %v1355 = vadd.f32 %v341, %v1354
      %v1356 = vpop.f32.mrb[0].mxu0
      %v1357 = vadd.f32 %v341, %v1356
      %1358 = vmatprep.mubr.bf16.mxu0 0
      %1359 = vmatmul.mubr.bf16.gmra.mrb[0].mxu0 %v583
      %v1360 = vpop.f32.mrb[0].mxu0
      %v1361 = vadd.f32 %v346, %v1360
      %v1362 = vpop.f32.mrb[0].mxu0
      %v1363 = vadd.f32 %v346, %v1362
      %v1364 = vpop.f32.mrb[0].mxu0
      %v1365 = vadd.f32 %v351, %v1364
      %v1366 = vpop.f32.mrb[0].mxu0
      %v1367 = vadd.f32 %v351, %v1366
      %1368 = vmatprep.mubr.bf16.mxu0 0
      %1369 = vmatmul.mubr.bf16.gmra.mrb[0].mxu0 %v586
      %v1370 = vpop.f32.mrb[0].mxu0
      %v1371 = vadd.f32 %v356, %v1370
      %v1372 = vpop.f32.mrb[0].mxu0
      %v1373 = vadd.f32 %v356, %v1372
      %v1374 = vpop.f32.mrb[0].mxu0
      %v1375 = vadd.f32 %v361, %v1374
      %v1376 = vpop.f32.mrb[0].mxu0
      %v1377 = vadd.f32 %v361, %v1376
      %1378 = vdwg.mxu0
      %1379 = vmatprep.subr.bf16.mxu0 %v514
      %1380 = vmatpush1.bf16.msra.mxu0 %v513
      %1381 = vmatprep.subr.bf16.mxu0 %v530
      %1382 = vmatpush1.bf16.msra.mxu0 %v529
      %1383 = vmatprep.subr.bf16.mxu0 0
      %1384 = vmatpush1.bf16.msra.mxu0 0
      %1385 = vmatprep.subr.bf16.mxu0 0
      %1386 = vmatpush1.bf16.msra.mxu0 0
      %1387 = vmatprep.subr.bf16.mxu0 0
      %1388 = vmatpush1.bf16.msra.mxu0 0
      %1389 = vmatprep.subr.bf16.mxu0 0
      %1390 = vmatpush1.bf16.msra.mxu0 0
      %1391 = vmatprep.subr.bf16.mxu0 0
      %1392 = vmatpush1.bf16.msra.mxu0 0
      %1393 = vmatprep.subr.bf16.mxu0 0
      %1394 = vmatpush1.bf16.msra.mxu0 0
      %1395 = vmatprep.subr.bf16.mxu0 0
      %1396 = vmatpush1.bf16.msra.mxu0 0
      %1397 = vmatprep.subr.bf16.mxu0 0
      %1398 = vmatpush1.bf16.msra.mxu0 0
      %1399 = vmatprep.subr.bf16.mxu0 0
      %1400 = vmatpush1.bf16.msra.mxu0 0
      %1401 = vmatprep.subr.bf16.mxu0 0
      %1402 = vmatpush1.bf16.msra.mxu0 0
      %1403 = vmatprep.subr.bf16.mxu0 0
      %1404 = vmatpush1.bf16.msra.mxu0 0
      %1405 = vmatprep.subr.bf16.mxu0 0
      %1406 = vmatpush1.bf16.msra.mxu0 0
      %1407 = vmatprep.subr.bf16.mxu0 0
      %1408 = vmatpush1.bf16.msra.mxu0 0
      %1409 = vmatprep.subr.bf16.mxu0 0
      %1410 = vmatpush1.bf16.msra.mxu0 0
      %1411 = vmatprep.mubr.bf16.mxu0 0
      %1412 = vmatmul.mubr.bf16.gmra.mrb[0].mxu0 %v565
      %v1413 = vpop.f32.mrb[0].mxu0
      %v1414 = vadd.f32 %v286, %v1413
      %v1415 = vpop.f32.mrb[0].mxu0
      %v1416 = vadd.f32 %v286, %v1415
      %v1417 = vpop.f32.mrb[0].mxu0
      %v1418 = vadd.f32 %v291, %v1417
      %v1419 = vpop.f32.mrb[0].mxu0
      %v1420 = vadd.f32 %v291, %v1419
      %1421 = vmatprep.mubr.bf16.mxu0 0
      %1422 = vmatmul.mubr.bf16.gmra.mrb[0].mxu0 %v568
      %v1423 = vpop.f32.mrb[0].mxu0
      %v1424 = vadd.f32 %v296, %v1423
      %v1425 = vpop.f32.mrb[0].mxu0
      %v1426 = vadd.f32 %v296, %v1425
      %v1427 = vpop.f32.mrb[0].mxu0
      %v1428 = vadd.f32 %v301, %v1427
      %v1429 = vpop.f32.mrb[0].mxu0
      %v1430 = vadd.f32 %v301, %v1429
      %1431 = vmatprep.mubr.bf16.mxu0 0
      %1432 = vmatmul.mubr.bf16.gmra.mrb[0].mxu0 %v571
      %v1433 = vpop.f32.mrb[0].mxu0
      %v1434 = vadd.f32 %v306, %v1433
      %v1435 = vpop.f32.mrb[0].mxu0
      %v1436 = vadd.f32 %v306, %v1435
      %v1437 = vpop.f32.mrb[0].mxu0
      %v1438 = vadd.f32 %v311, %v1437
      %v1439 = vpop.f32.mrb[0].mxu0
      %v1440 = vadd.f32 %v311, %v1439
      %1441 = vmatprep.mubr.bf16.mxu0 0
      %1442 = vmatmul.mubr.bf16.gmra.mrb[0].mxu0 %v574
      %v1443 = vpop.f32.mrb[0].mxu0
      %v1444 = vadd.f32 %v316, %v1443
      %v1445 = vpop.f32.mrb[0].mxu0
      %v1446 = vadd.f32 %v316, %v1445
      %v1447 = vpop.f32.mrb[0].mxu0
      %v1448 = vadd.f32 %v321, %v1447
      %v1449 = vpop.f32.mrb[0].mxu0
      %v1450 = vadd.f32 %v321, %v1449
      %1451 = vmatprep.mubr.bf16.mxu0 0
      %1452 = vmatmul.mubr.bf16.gmra.mrb[0].mxu0 %v577
      %v1453 = vpop.f32.mrb[0].mxu0
      %v1454 = vadd.f32 %v326, %v1453
      %v1455 = vpop.f32.mrb[0].mxu0
      %v1456 = vadd.f32 %v326, %v1455
      %v1457 = vpop.f32.mrb[0].mxu0
      %v1458 = vadd.f32 %v331, %v1457
      %v1459 = vpop.f32.mrb[0].mxu0
      %v1460 = vadd.f32 %v331, %v1459
      %1461 = vmatprep.mubr.bf16.mxu0 0
      %1462 = vmatmul.mubr.bf16.gmra.mrb[0].mxu0 %v580
      %v1463 = vpop.f32.mrb[0].mxu0
      %v1464 = vadd.f32 %v336, %v1463
      %v1465 = vpop.f32.mrb[0].mxu0
      %v1466 = vadd.f32 %v336, %v1465
      %v1467 = vpop.f32.mrb[0].mxu0
      %v1468 = vadd.f32 %v341, %v1467
      %v1469 = vpop.f32.mrb[0].mxu0
      %v1470 = vadd.f32 %v341, %v1469
      %1471 = vmatprep.mubr.bf16.mxu0 0
      %1472 = vmatmul.mubr.bf16.gmra.mrb[0].mxu0 %v583
      %v1473 = vpop.f32.mrb[0].mxu0
      %v1474 = vadd.f32 %v346, %v1473
      %v1475 = vpop.f32.mrb[0].mxu0
      %v1476 = vadd.f32 %v346, %v1475
      %v1477 = vpop.f32.mrb[0].mxu0
      %v1478 = vadd.f32 %v351, %v1477
      %v1479 = vpop.f32.mrb[0].mxu0
      %v1480 = vadd.f32 %v351, %v1479
      %1481 = vmatprep.mubr.bf16.mxu0 0
      %1482 = vmatmul.mubr.bf16.gmra.mrb[0].mxu0 %v586
      %v1483 = vpop.f32.mrb[0].mxu0
      %v1484 = vadd.f32 %v356, %v1483
      %v1485 = vpop.f32.mrb[0].mxu0
      %v1486 = vadd.f32 %v356, %v1485
      %v1487 = vpop.f32.mrb[0].mxu0
      %v1488 = vadd.f32 %v361, %v1487
      %v1489 = vpop.f32.mrb[0].mxu0
      %v1490 = vadd.f32 %v361, %v1489
      %1491 = vdwg.mxu0
      %v1492 = vmax.f32 %v623, 0.0
      %v1493 = vmax.f32 %v625, 0.0
      %v1494 = vmax.f32 %v736, 0.0
      %v1495 = vmax.f32 %v738, 0.0
      %v1496 = vmax.f32 %v849, 0.0
      %v1497 = vmax.f32 %v851, 0.0
      %v1498 = vmax.f32 %v962, 0.0
      %v1499 = vmax.f32 %v964, 0.0
      %v1500 = vmax.f32 %v1075, 0.0
      %v1501 = vmax.f32 %v1077, 0.0
      %v1502 = vmax.f32 %v1188, 0.0
      %v1503 = vmax.f32 %v1190, 0.0
      %v1504 = vmax.f32 %v1301, 0.0
      %v1505 = vmax.f32 %v1303, 0.0
      %v1506 = vmax.f32 %v1414, 0.0
      %v1507 = vmax.f32 %v1416, 0.0
      %v1508 = vmax.f32 %v627, 0.0
      %v1509 = vmax.f32 %v629, 0.0
      %v1510 = vmax.f32 %v740, 0.0
      %v1511 = vmax.f32 %v742, 0.0
      %v1512 = vmax.f32 %v853, 0.0
      %v1513 = vmax.f32 %v855, 0.0
      %v1514 = vmax.f32 %v966, 0.0
      %v1515 = vmax.f32 %v968, 0.0
      %v1516 = vmax.f32 %v1079, 0.0
      %v1517 = vmax.f32 %v1081, 0.0
      %v1518 = vmax.f32 %v1192, 0.0
      %v1519 = vmax.f32 %v1194, 0.0
      %v1520 = vmax.f32 %v1305, 0.0
      %v1521 = vmax.f32 %v1307, 0.0
      %v1522 = vmax.f32 %v1418, 0.0
      %v1523 = vmax.f32 %v1420, 0.0
      %v1524 = vmax.f32 %v633, 0.0
      %v1525 = vmax.f32 %v635, 0.0
      %v1526 = vmax.f32 %v746, 0.0
      %v1527 = vmax.f32 %v748, 0.0
      %v1528 = vmax.f32 %v859, 0.0
      %v1529 = vmax.f32 %v861, 0.0
      %v1530 = vmax.f32 %v972, 0.0
      %v1531 = vmax.f32 %v974, 0.0
      %v1532 = vmax.f32 %v1085, 0.0
      %v1533 = vmax.f32 %v1087, 0.0
      %v1534 = vmax.f32 %v1198, 0.0
      %v1535 = vmax.f32 %v1200, 0.0
      %v1536 = vmax.f32 %v1311, 0.0
      %v1537 = vmax.f32 %v1313, 0.0
      %v1538 = vmax.f32 %v1424, 0.0
      %v1539 = vmax.f32 %v1426, 0.0
      %v1540 = vmax.f32 %v637, 0.0
      %v1541 = vmax.f32 %v639, 0.0
      %v1542 = vmax.f32 %v750, 0.0
      %v1543 = vmax.f32 %v752, 0.0
      %v1544 = vmax.f32 %v863, 0.0
      %v1545 = vmax.f32 %v865, 0.0
      %v1546 = vmax.f32 %v976, 0.0
      %v1547 = vmax.f32 %v978, 0.0
      %v1548 = vmax.f32 %v1089, 0.0
      %v1549 = vmax.f32 %v1091, 0.0
      %v1550 = vmax.f32 %v1202, 0.0
      %v1551 = vmax.f32 %v1204, 0.0
      %v1552 = vmax.f32 %v1315, 0.0
      %v1553 = vmax.f32 %v1317, 0.0
      %v1554 = vmax.f32 %v1428, 0.0
      %v1555 = vmax.f32 %v1430, 0.0
      %v1556 = vmax.f32 %v643, 0.0
      %v1557 = vmax.f32 %v645, 0.0
      %v1558 = vmax.f32 %v756, 0.0
      %v1559 = vmax.f32 %v758, 0.0
      %v1560 = vmax.f32 %v869, 0.0
      %v1561 = vmax.f32 %v871, 0.0
      %v1562 = vmax.f32 %v982, 0.0
      %v1563 = vmax.f32 %v984, 0.0
      %v1564 = vmax.f32 %v1095, 0.0
      %v1565 = vmax.f32 %v1097, 0.0
      %v1566 = vmax.f32 %v1208, 0.0
      %v1567 = vmax.f32 %v1210, 0.0
      %v1568 = vmax.f32 %v1321, 0.0
      %v1569 = vmax.f32 %v1323, 0.0
      %v1570 = vmax.f32 %v1434, 0.0
      %v1571 = vmax.f32 %v1436, 0.0
      %v1572 = vmax.f32 %v647, 0.0
      %v1573 = vmax.f32 %v649, 0.0
      %v1574 = vmax.f32 %v760, 0.0
      %v1575 = vmax.f32 %v762, 0.0
      %v1576 = vmax.f32 %v873, 0.0
      %v1577 = vmax.f32 %v875, 0.0
      %v1578 = vmax.f32 %v986, 0.0
      %v1579 = vmax.f32 %v988, 0.0
      %v1580 = vmax.f32 %v1099, 0.0
      %v1581 = vmax.f32 %v1101, 0.0
      %v1582 = vmax.f32 %v1212, 0.0
      %v1583 = vmax.f32 %v1214, 0.0
      %v1584 = vmax.f32 %v1325, 0.0
      %v1585 = vmax.f32 %v1327, 0.0
      %v1586 = vmax.f32 %v1438, 0.0
      %v1587 = vmax.f32 %v1440, 0.0
      %v1588 = vmax.f32 %v653, 0.0
      %v1589 = vmax.f32 %v655, 0.0
      %v1590 = vmax.f32 %v766, 0.0
      %v1591 = vmax.f32 %v768, 0.0
      %v1592 = vmax.f32 %v879, 0.0
      %v1593 = vmax.f32 %v881, 0.0
      %v1594 = vmax.f32 %v992, 0.0
      %v1595 = vmax.f32 %v994, 0.0
      %v1596 = vmax.f32 %v1105, 0.0
      %v1597 = vmax.f32 %v1107, 0.0
      %v1598 = vmax.f32 %v1218, 0.0
      %v1599 = vmax.f32 %v1220, 0.0
      %v1600 = vmax.f32 %v1331, 0.0
      %v1601 = vmax.f32 %v1333, 0.0
      %v1602 = vmax.f32 %v1444, 0.0
      %v1603 = vmax.f32 %v1446, 0.0
      %v1604 = vmax.f32 %v657, 0.0
      %v1605 = vmax.f32 %v659, 0.0
      %v1606 = vmax.f32 %v770, 0.0
      %v1607 = vmax.f32 %v772, 0.0
      %v1608 = vmax.f32 %v883, 0.0
      %v1609 = vmax.f32 %v885, 0.0
      %v1610 = vmax.f32 %v996, 0.0
      %v1611 = vmax.f32 %v998, 0.0
      %v1612 = vmax.f32 %v1109, 0.0
      %v1613 = vmax.f32 %v1111, 0.0
      %v1614 = vmax.f32 %v1222, 0.0
      %v1615 = vmax.f32 %v1224, 0.0
      %v1616 = vmax.f32 %v1335, 0.0
      %v1617 = vmax.f32 %v1337, 0.0
      %v1618 = vmax.f32 %v1448, 0.0
      %v1619 = vmax.f32 %v1450, 0.0
      %v1620 = vmax.f32 %v663, 0.0
      %v1621 = vmax.f32 %v665, 0.0
      %v1622 = vmax.f32 %v776, 0.0
      %v1623 = vmax.f32 %v778, 0.0
      %v1624 = vmax.f32 %v889, 0.0
      %v1625 = vmax.f32 %v891, 0.0
      %v1626 = vmax.f32 %v1002, 0.0
      %v1627 = vmax.f32 %v1004, 0.0
      %v1628 = vmax.f32 %v1115, 0.0
      %v1629 = vmax.f32 %v1117, 0.0
      %v1630 = vmax.f32 %v1228, 0.0
      %v1631 = vmax.f32 %v1230, 0.0
      %v1632 = vmax.f32 %v1341, 0.0
      %v1633 = vmax.f32 %v1343, 0.0
      %v1634 = vmax.f32 %v1454, 0.0
      %v1635 = vmax.f32 %v1456, 0.0
      %v1636 = vmax.f32 %v667, 0.0
      %v1637 = vmax.f32 %v669, 0.0
      %v1638 = vmax.f32 %v780, 0.0
      %v1639 = vmax.f32 %v782, 0.0
      %v1640 = vmax.f32 %v893, 0.0
      %v1641 = vmax.f32 %v895, 0.0
      %v1642 = vmax.f32 %v1006, 0.0
      %v1643 = vmax.f32 %v1008, 0.0
      %v1644 = vmax.f32 %v1119, 0.0
      %v1645 = vmax.f32 %v1121, 0.0
      %v1646 = vmax.f32 %v1232, 0.0
      %v1647 = vmax.f32 %v1234, 0.0
      %v1648 = vmax.f32 %v1345, 0.0
      %v1649 = vmax.f32 %v1347, 0.0
      %v1650 = vmax.f32 %v1458, 0.0
      %v1651 = vmax.f32 %v1460, 0.0
      %v1652 = vmax.f32 %v673, 0.0
      %v1653 = vmax.f32 %v675, 0.0
      %v1654 = vmax.f32 %v786, 0.0
      %v1655 = vmax.f32 %v788, 0.0
      %v1656 = vmax.f32 %v899, 0.0
      %v1657 = vmax.f32 %v901, 0.0
      %v1658 = vmax.f32 %v1012, 0.0
      %v1659 = vmax.f32 %v1014, 0.0
      %v1660 = vmax.f32 %v1125, 0.0
      %v1661 = vmax.f32 %v1127, 0.0
      %v1662 = vmax.f32 %v1238, 0.0
      %v1663 = vmax.f32 %v1240, 0.0
      %v1664 = vmax.f32 %v1351, 0.0
      %v1665 = vmax.f32 %v1353, 0.0
      %v1666 = vmax.f32 %v1464, 0.0
      %v1667 = vmax.f32 %v1466, 0.0
      %v1668 = vmax.f32 %v677, 0.0
      %v1669 = vmax.f32 %v679, 0.0
      %v1670 = vmax.f32 %v790, 0.0
      %v1671 = vmax.f32 %v792, 0.0
      %v1672 = vmax.f32 %v903, 0.0
      %v1673 = vmax.f32 %v905, 0.0
      %v1674 = vmax.f32 %v1016, 0.0
      %v1675 = vmax.f32 %v1018, 0.0
      %v1676 = vmax.f32 %v1129, 0.0
      %v1677 = vmax.f32 %v1131, 0.0
      %v1678 = vmax.f32 %v1242, 0.0
      %v1679 = vmax.f32 %v1244, 0.0
      %v1680 = vmax.f32 %v1355, 0.0
      %v1681 = vmax.f32 %v1357, 0.0
      %v1682 = vmax.f32 %v1468, 0.0
      %v1683 = vmax.f32 %v1470, 0.0
      %v1684 = vmax.f32 %v683, 0.0
      %v1685 = vmax.f32 %v685, 0.0
      %v1686 = vmax.f32 %v796, 0.0
      %v1687 = vmax.f32 %v798, 0.0
      %v1688 = vmax.f32 %v909, 0.0
      %v1689 = vmax.f32 %v911, 0.0
      %v1690 = vmax.f32 %v1022, 0.0
      %v1691 = vmax.f32 %v1024, 0.0
      %v1692 = vmax.f32 %v1135, 0.0
      %v1693 = vmax.f32 %v1137, 0.0
      %v1694 = vmax.f32 %v1248, 0.0
      %v1695 = vmax.f32 %v1250, 0.0
      %v1696 = vmax.f32 %v1361, 0.0
      %v1697 = vmax.f32 %v1363, 0.0
      %v1698 = vmax.f32 %v1474, 0.0
      %v1699 = vmax.f32 %v1476, 0.0
      %v1700 = vmax.f32 %v687, 0.0
      %v1701 = vmax.f32 %v689, 0.0
      %v1702 = vmax.f32 %v800, 0.0
      %v1703 = vmax.f32 %v802, 0.0
      %v1704 = vmax.f32 %v913, 0.0
      %v1705 = vmax.f32 %v915, 0.0
      %v1706 = vmax.f32 %v1026, 0.0
      %v1707 = vmax.f32 %v1028, 0.0
      %v1708 = vmax.f32 %v1139, 0.0
      %v1709 = vmax.f32 %v1141, 0.0
      %v1710 = vmax.f32 %v1252, 0.0
      %v1711 = vmax.f32 %v1254, 0.0
      %v1712 = vmax.f32 %v1365, 0.0
      %v1713 = vmax.f32 %v1367, 0.0
      %v1714 = vmax.f32 %v1478, 0.0
      %v1715 = vmax.f32 %v1480, 0.0
      %v1716 = vmax.f32 %v693, 0.0
      %v1717 = vmax.f32 %v695, 0.0
      %v1718 = vmax.f32 %v806, 0.0
      %v1719 = vmax.f32 %v808, 0.0
      %v1720 = vmax.f32 %v919, 0.0
      %v1721 = vmax.f32 %v921, 0.0
      %v1722 = vmax.f32 %v1032, 0.0
      %v1723 = vmax.f32 %v1034, 0.0
      %v1724 = vmax.f32 %v1145, 0.0
      %v1725 = vmax.f32 %v1147, 0.0
      %v1726 = vmax.f32 %v1258, 0.0
      %v1727 = vmax.f32 %v1260, 0.0
      %v1728 = vmax.f32 %v1371, 0.0
      %v1729 = vmax.f32 %v1373, 0.0
      %v1730 = vmax.f32 %v1484, 0.0
      %v1731 = vmax.f32 %v1486, 0.0
      %v1732 = vmax.f32 %v697, 0.0
      %v1733 = vmax.f32 %v699, 0.0
      %v1734 = vmax.f32 %v810, 0.0
      %v1735 = vmax.f32 %v812, 0.0
      %v1736 = vmax.f32 %v923, 0.0
      %v1737 = vmax.f32 %v925, 0.0
      %v1738 = vmax.f32 %v1036, 0.0
      %v1739 = vmax.f32 %v1038, 0.0
      %v1740 = vmax.f32 %v1149, 0.0
      %v1741 = vmax.f32 %v1151, 0.0
      %v1742 = vmax.f32 %v1262, 0.0
      %v1743 = vmax.f32 %v1264, 0.0
      %v1744 = vmax.f32 %v1375, 0.0
      %v1745 = vmax.f32 %v1377, 0.0
      %v1746 = vmax.f32 %v1488, 0.0
      %v1747 = vmax.f32 %v1490, 0.0
      %v1748 = vpack.c.bf16 %v1508, %v1492
      %v1749 = vpack.c.bf16 %v1509, %v1493
      %v1750 = vpack.c.bf16 %v1510, %v1494
      %v1751 = vpack.c.bf16 %v1511, %v1495
      %v1752 = vpack.c.bf16 %v1512, %v1496
      %v1753 = vpack.c.bf16 %v1513, %v1497
      %v1754 = vpack.c.bf16 %v1514, %v1498
      %v1755 = vpack.c.bf16 %v1515, %v1499
      %v1756 = vpack.c.bf16 %v1516, %v1500
      %v1757 = vpack.c.bf16 %v1517, %v1501
      %v1758 = vpack.c.bf16 %v1518, %v1502
      %v1759 = vpack.c.bf16 %v1519, %v1503
      %v1760 = vpack.c.bf16 %v1520, %v1504
      %v1761 = vpack.c.bf16 %v1521, %v1505
      %v1762 = vpack.c.bf16 %v1522, %v1506
      %v1763 = vpack.c.bf16 %v1523, %v1507
      %v1764 = vpack.c.bf16 %v1540, %v1524
      %v1765 = vpack.c.bf16 %v1541, %v1525
      %v1766 = vpack.c.bf16 %v1542, %v1526
      %v1767 = vpack.c.bf16 %v1543, %v1527
      %v1768 = vpack.c.bf16 %v1544, %v1528
      %v1769 = vpack.c.bf16 %v1545, %v1529
      %v1770 = vpack.c.bf16 %v1546, %v1530
      %v1771 = vpack.c.bf16 %v1547, %v1531
      %v1772 = vpack.c.bf16 %v1548, %v1532
      %v1773 = vpack.c.bf16 %v1549, %v1533
      %v1774 = vpack.c.bf16 %v1550, %v1534
      %v1775 = vpack.c.bf16 %v1551, %v1535
      %v1776 = vpack.c.bf16 %v1552, %v1536
      %v1777 = vpack.c.bf16 %v1553, %v1537
      %v1778 = vpack.c.bf16 %v1554, %v1538
      %v1779 = vpack.c.bf16 %v1555, %v1539
      %v1780 = vpack.c.bf16 %v1572, %v1556
      %v1781 = vpack.c.bf16 %v1573, %v1557
      %v1782 = vpack.c.bf16 %v1574, %v1558
      %v1783 = vpack.c.bf16 %v1575, %v1559
      %v1784 = vpack.c.bf16 %v1576, %v1560
      %v1785 = vpack.c.bf16 %v1577, %v1561
      %v1786 = vpack.c.bf16 %v1578, %v1562
      %v1787 = vpack.c.bf16 %v1579, %v1563
      %v1788 = vpack.c.bf16 %v1580, %v1564
      %v1789 = vpack.c.bf16 %v1581, %v1565
      %v1790 = vpack.c.bf16 %v1582, %v1566
      %v1791 = vpack.c.bf16 %v1583, %v1567
      %v1792 = vpack.c.bf16 %v1584, %v1568
      %v1793 = vpack.c.bf16 %v1585, %v1569
      %v1794 = vpack.c.bf16 %v1586, %v1570
      %v1795 = vpack.c.bf16 %v1587, %v1571
      %v1796 = vpack.c.bf16 %v1604, %v1588
      %v1797 = vpack.c.bf16 %v1605, %v1589
      %v1798 = vpack.c.bf16 %v1606, %v1590
      %v1799 = vpack.c.bf16 %v1607, %v1591
      %v1800 = vpack.c.bf16 %v1608, %v1592
      %v1801 = vpack.c.bf16 %v1609, %v1593
      %v1802 = vpack.c.bf16 %v1610, %v1594
      %v1803 = vpack.c.bf16 %v1611, %v1595
      %v1804 = vpack.c.bf16 %v1612, %v1596
      %v1805 = vpack.c.bf16 %v1613, %v1597
      %v1806 = vpack.c.bf16 %v1614, %v1598
      %v1807 = vpack.c.bf16 %v1615, %v1599
      %v1808 = vpack.c.bf16 %v1616, %v1600
      %v1809 = vpack.c.bf16 %v1617, %v1601
      %v1810 = vpack.c.bf16 %v1618, %v1602
      %v1811 = vpack.c.bf16 %v1619, %v1603
      %v1812 = vpack.c.bf16 %v1636, %v1620
      %v1813 = vpack.c.bf16 %v1637, %v1621
      %v1814 = vpack.c.bf16 %v1638, %v1622
      %v1815 = vpack.c.bf16 %v1639, %v1623
      %v1816 = vpack.c.bf16 %v1640, %v1624
      %v1817 = vpack.c.bf16 %v1641, %v1625
      %v1818 = vpack.c.bf16 %v1642, %v1626
      %v1819 = vpack.c.bf16 %v1643, %v1627
      %v1820 = vpack.c.bf16 %v1644, %v1628
      %v1821 = vpack.c.bf16 %v1645, %v1629
      %v1822 = vpack.c.bf16 %v1646, %v1630
      %v1823 = vpack.c.bf16 %v1647, %v1631
      %v1824 = vpack.c.bf16 %v1648, %v1632
      %v1825 = vpack.c.bf16 %v1649, %v1633
      %v1826 = vpack.c.bf16 %v1650, %v1634
      %v1827 = vpack.c.bf16 %v1651, %v1635
      %v1828 = vpack.c.bf16 %v1668, %v1652
      %v1829 = vpack.c.bf16 %v1669, %v1653
      %v1830 = vpack.c.bf16 %v1670, %v1654
      %v1831 = vpack.c.bf16 %v1671, %v1655
      %v1832 = vpack.c.bf16 %v1672, %v1656
      %v1833 = vpack.c.bf16 %v1673, %v1657
      %v1834 = vpack.c.bf16 %v1674, %v1658
      %v1835 = vpack.c.bf16 %v1675, %v1659
      %v1836 = vpack.c.bf16 %v1676, %v1660
      %v1837 = vpack.c.bf16 %v1677, %v1661
      %v1838 = vpack.c.bf16 %v1678, %v1662
      %v1839 = vpack.c.bf16 %v1679, %v1663
      %v1840 = vpack.c.bf16 %v1680, %v1664
      %v1841 = vpack.c.bf16 %v1681, %v1665
      %v1842 = vpack.c.bf16 %v1682, %v1666
      %v1843 = vpack.c.bf16 %v1683, %v1667
      %v1844 = vpack.c.bf16 %v1700, %v1684
      %v1845 = vpack.c.bf16 %v1701, %v1685
      %v1846 = vpack.c.bf16 %v1702, %v1686
      %v1847 = vpack.c.bf16 %v1703, %v1687
      %v1848 = vpack.c.bf16 %v1704, %v1688
      %v1849 = vpack.c.bf16 %v1705, %v1689
      %v1850 = vpack.c.bf16 %v1706, %v1690
      %v1851 = vpack.c.bf16 %v1707, %v1691
      %v1852 = vpack.c.bf16 %v1708, %v1692
      %v1853 = vpack.c.bf16 %v1709, %v1693
      %v1854 = vpack.c.bf16 %v1710, %v1694
      %v1855 = vpack.c.bf16 %v1711, %v1695
      %v1856 = vpack.c.bf16 %v1712, %v1696
      %v1857 = vpack.c.bf16 %v1713, %v1697
      %v1858 = vpack.c.bf16 %v1714, %v1698
      %v1859 = vpack.c.bf16 %v1715, %v1699
      %v1860 = vpack.c.bf16 %v1732, %v1716
      %v1861 = vpack.c.bf16 %v1733, %v1717
      %v1862 = vpack.c.bf16 %v1734, %v1718
      %v1863 = vpack.c.bf16 %v1735, %v1719
      %v1864 = vpack.c.bf16 %v1736, %v1720
      %v1865 = vpack.c.bf16 %v1737, %v1721
      %v1866 = vpack.c.bf16 %v1738, %v1722
      %v1867 = vpack.c.bf16 %v1739, %v1723
      %v1868 = vpack.c.bf16 %v1740, %v1724
      %v1869 = vpack.c.bf16 %v1741, %v1725
      %v1870 = vpack.c.bf16 %v1742, %v1726
      %v1871 = vpack.c.bf16 %v1743, %v1727
      %v1872 = vpack.c.bf16 %v1744, %v1728
      %v1873 = vpack.c.bf16 %v1745, %v1729
      %v1874 = vpack.c.bf16 %v1746, %v1730
      %v1875 = vpack.c.bf16 %v1747, %v1731
      %v2004 = vunpack.c.l.b16 %v1748
      %v2005 = vunpack.c.l.b16 %v1749
      %v2006 = vunpack.c.l.b16 %v1750
      %v2007 = vunpack.c.l.b16 %v1751
      %v2008 = vunpack.c.l.b16 %v1752
      %v2009 = vunpack.c.l.b16 %v1753
      %v2010 = vunpack.c.l.b16 %v1754
      %v2011 = vunpack.c.l.b16 %v1755
      %v2012 = vunpack.c.l.b16 %v1756
      %v2013 = vunpack.c.l.b16 %v1757
      %v2014 = vunpack.c.l.b16 %v1758
      %v2015 = vunpack.c.l.b16 %v1759
      %v2016 = vunpack.c.l.b16 %v1760
      %v2017 = vunpack.c.l.b16 %v1761
      %v2018 = vunpack.c.l.b16 %v1762
      %v2019 = vunpack.c.l.b16 %v1763
      %v2020 = vunpack.c.h.b16 %v1748
      %v2021 = vunpack.c.h.b16 %v1749
      %v2022 = vunpack.c.h.b16 %v1750
      %v2023 = vunpack.c.h.b16 %v1751
      %v2024 = vunpack.c.h.b16 %v1752
      %v2025 = vunpack.c.h.b16 %v1753
      %v2026 = vunpack.c.h.b16 %v1754
      %v2027 = vunpack.c.h.b16 %v1755
      %v2028 = vunpack.c.h.b16 %v1756
      %v2029 = vunpack.c.h.b16 %v1757
      %v2030 = vunpack.c.h.b16 %v1758
      %v2031 = vunpack.c.h.b16 %v1759
      %v2032 = vunpack.c.h.b16 %v1760
      %v2033 = vunpack.c.h.b16 %v1761
      %v2034 = vunpack.c.h.b16 %v1762
      %v2035 = vunpack.c.h.b16 %v1763
      %v2036 = vunpack.c.l.b16 %v1764
      %v2037 = vunpack.c.l.b16 %v1765
      %v2038 = vunpack.c.l.b16 %v1766
      %v2039 = vunpack.c.l.b16 %v1767
      %v2040 = vunpack.c.l.b16 %v1768
      %v2041 = vunpack.c.l.b16 %v1769
      %v2042 = vunpack.c.l.b16 %v1770
      %v2043 = vunpack.c.l.b16 %v1771
      %v2044 = vunpack.c.l.b16 %v1772
      %v2045 = vunpack.c.l.b16 %v1773
      %v2046 = vunpack.c.l.b16 %v1774
      %v2047 = vunpack.c.l.b16 %v1775
      %v2048 = vunpack.c.l.b16 %v1776
      %v2049 = vunpack.c.l.b16 %v1777
      %v2050 = vunpack.c.l.b16 %v1778
      %v2051 = vunpack.c.l.b16 %v1779
      %v2052 = vunpack.c.h.b16 %v1764
      %v2053 = vunpack.c.h.b16 %v1765
      %v2054 = vunpack.c.h.b16 %v1766
      %v2055 = vunpack.c.h.b16 %v1767
      %v2056 = vunpack.c.h.b16 %v1768
      %v2057 = vunpack.c.h.b16 %v1769
      %v2058 = vunpack.c.h.b16 %v1770
      %v2059 = vunpack.c.h.b16 %v1771
      %v2060 = vunpack.c.h.b16 %v1772
      %v2061 = vunpack.c.h.b16 %v1773
      %v2062 = vunpack.c.h.b16 %v1774
      %v2063 = vunpack.c.h.b16 %v1775
      %v2064 = vunpack.c.h.b16 %v1776
      %v2065 = vunpack.c.h.b16 %v1777
      %v2066 = vunpack.c.h.b16 %v1778
      %v2067 = vunpack.c.h.b16 %v1779
      %v2068 = vunpack.c.l.b16 %v1780
      %v2069 = vunpack.c.l.b16 %v1781
      %v2070 = vunpack.c.l.b16 %v1782
      %v2071 = vunpack.c.l.b16 %v1783
      %v2072 = vunpack.c.l.b16 %v1784
      %v2073 = vunpack.c.l.b16 %v1785
      %v2074 = vunpack.c.l.b16 %v1786
      %v2075 = vunpack.c.l.b16 %v1787
      %v2076 = vunpack.c.l.b16 %v1788
      %v2077 = vunpack.c.l.b16 %v1789
      %v2078 = vunpack.c.l.b16 %v1790
      %v2079 = vunpack.c.l.b16 %v1791
      %v2080 = vunpack.c.l.b16 %v1792
      %v2081 = vunpack.c.l.b16 %v1793
      %v2082 = vunpack.c.l.b16 %v1794
      %v2083 = vunpack.c.l.b16 %v1795
      %v2084 = vunpack.c.h.b16 %v1780
      %v2085 = vunpack.c.h.b16 %v1781
      %v2086 = vunpack.c.h.b16 %v1782
      %v2087 = vunpack.c.h.b16 %v1783
      %v2088 = vunpack.c.h.b16 %v1784
      %v2089 = vunpack.c.h.b16 %v1785
      %v2090 = vunpack.c.h.b16 %v1786
      %v2091 = vunpack.c.h.b16 %v1787
      %v2092 = vunpack.c.h.b16 %v1788
      %v2093 = vunpack.c.h.b16 %v1789
      %v2094 = vunpack.c.h.b16 %v1790
      %v2095 = vunpack.c.h.b16 %v1791
      %v2096 = vunpack.c.h.b16 %v1792
      %v2097 = vunpack.c.h.b16 %v1793
      %v2098 = vunpack.c.h.b16 %v1794
      %v2099 = vunpack.c.h.b16 %v1795
      %v2100 = vunpack.c.l.b16 %v1796
      %v2101 = vunpack.c.l.b16 %v1797
      %v2102 = vunpack.c.l.b16 %v1798
      %v2103 = vunpack.c.l.b16 %v1799
      %v2104 = vunpack.c.l.b16 %v1800
      %v2105 = vunpack.c.l.b16 %v1801
      %v2106 = vunpack.c.l.b16 %v1802
      %v2107 = vunpack.c.l.b16 %v1803
      %v2108 = vunpack.c.l.b16 %v1804
      %v2109 = vunpack.c.l.b16 %v1805
      %v2110 = vunpack.c.l.b16 %v1806
      %v2111 = vunpack.c.l.b16 %v1807
      %v2112 = vunpack.c.l.b16 %v1808
      %v2113 = vunpack.c.l.b16 %v1809
      %v2114 = vunpack.c.l.b16 %v1810
      %v2115 = vunpack.c.l.b16 %v1811
      %v2116 = vunpack.c.h.b16 %v1796
      %v2117 = vunpack.c.h.b16 %v1797
      %v2118 = vunpack.c.h.b16 %v1798
      %v2119 = vunpack.c.h.b16 %v1799
      %v2120 = vunpack.c.h.b16 %v1800
      %v2121 = vunpack.c.h.b16 %v1801
      %v2122 = vunpack.c.h.b16 %v1802
      %v2123 = vunpack.c.h.b16 %v1803
      %v2124 = vunpack.c.h.b16 %v1804
      %v2125 = vunpack.c.h.b16 %v1805
      %v2126 = vunpack.c.h.b16 %v1806
      %v2127 = vunpack.c.h.b16 %v1807
      %v2128 = vunpack.c.h.b16 %v1808
      %v2129 = vunpack.c.h.b16 %v1809
      %v2130 = vunpack.c.h.b16 %v1810
      %v2131 = vunpack.c.h.b16 %v1811
      %v2132 = vunpack.c.l.b16 %v1812
      %v2133 = vunpack.c.l.b16 %v1813
      %v2134 = vunpack.c.l.b16 %v1814
      %v2135 = vunpack.c.l.b16 %v1815
      %v2136 = vunpack.c.l.b16 %v1816
      %v2137 = vunpack.c.l.b16 %v1817
      %v2138 = vunpack.c.l.b16 %v1818
      %v2139 = vunpack.c.l.b16 %v1819
      %v2140 = vunpack.c.l.b16 %v1820
      %v2141 = vunpack.c.l.b16 %v1821
      %v2142 = vunpack.c.l.b16 %v1822
      %v2143 = vunpack.c.l.b16 %v1823
      %v2144 = vunpack.c.l.b16 %v1824
      %v2145 = vunpack.c.l.b16 %v1825
      %v2146 = vunpack.c.l.b16 %v1826
      %v2147 = vunpack.c.l.b16 %v1827
      %v2148 = vunpack.c.h.b16 %v1812
      %v2149 = vunpack.c.h.b16 %v1813
      %v2150 = vunpack.c.h.b16 %v1814
      %v2151 = vunpack.c.h.b16 %v1815
      %v2152 = vunpack.c.h.b16 %v1816
      %v2153 = vunpack.c.h.b16 %v1817
      %v2154 = vunpack.c.h.b16 %v1818
      %v2155 = vunpack.c.h.b16 %v1819
      %v2156 = vunpack.c.h.b16 %v1820
      %v2157 = vunpack.c.h.b16 %v1821
      %v2158 = vunpack.c.h.b16 %v1822
      %v2159 = vunpack.c.h.b16 %v1823
      %v2160 = vunpack.c.h.b16 %v1824
      %v2161 = vunpack.c.h.b16 %v1825
      %v2162 = vunpack.c.h.b16 %v1826
      %v2163 = vunpack.c.h.b16 %v1827
      %v2164 = vunpack.c.l.b16 %v1828
      %v2165 = vunpack.c.l.b16 %v1829
      %v2166 = vunpack.c.l.b16 %v1830
      %v2167 = vunpack.c.l.b16 %v1831
      %v2168 = vunpack.c.l.b16 %v1832
      %v2169 = vunpack.c.l.b16 %v1833
      %v2170 = vunpack.c.l.b16 %v1834
      %v2171 = vunpack.c.l.b16 %v1835
      %v2172 = vunpack.c.l.b16 %v1836
      %v2173 = vunpack.c.l.b16 %v1837
      %v2174 = vunpack.c.l.b16 %v1838
      %v2175 = vunpack.c.l.b16 %v1839
      %v2176 = vunpack.c.l.b16 %v1840
      %v2177 = vunpack.c.l.b16 %v1841
      %v2178 = vunpack.c.l.b16 %v1842
      %v2179 = vunpack.c.l.b16 %v1843
      %v2180 = vunpack.c.h.b16 %v1828
      %v2181 = vunpack.c.h.b16 %v1829
      %v2182 = vunpack.c.h.b16 %v1830
      %v2183 = vunpack.c.h.b16 %v1831
      %v2184 = vunpack.c.h.b16 %v1832
      %v2185 = vunpack.c.h.b16 %v1833
      %v2186 = vunpack.c.h.b16 %v1834
      %v2187 = vunpack.c.h.b16 %v1835
      %v2188 = vunpack.c.h.b16 %v1836
      %v2189 = vunpack.c.h.b16 %v1837
      %v2190 = vunpack.c.h.b16 %v1838
      %v2191 = vunpack.c.h.b16 %v1839
      %v2192 = vunpack.c.h.b16 %v1840
      %v2193 = vunpack.c.h.b16 %v1841
      %v2194 = vunpack.c.h.b16 %v1842
      %v2195 = vunpack.c.h.b16 %v1843
      %v2196 = vunpack.c.l.b16 %v1844
      %v2197 = vunpack.c.l.b16 %v1845
      %v2198 = vunpack.c.l.b16 %v1846
      %v2199 = vunpack.c.l.b16 %v1847
      %v2200 = vunpack.c.l.b16 %v1848
      %v2201 = vunpack.c.l.b16 %v1849
      %v2202 = vunpack.c.l.b16 %v1850
      %v2203 = vunpack.c.l.b16 %v1851
      %v2204 = vunpack.c.l.b16 %v1852
      %v2205 = vunpack.c.l.b16 %v1853
      %v2206 = vunpack.c.l.b16 %v1854
      %v2207 = vunpack.c.l.b16 %v1855
      %v2208 = vunpack.c.l.b16 %v1856
      %v2209 = vunpack.c.l.b16 %v1857
      %v2210 = vunpack.c.l.b16 %v1858
      %v2211 = vunpack.c.l.b16 %v1859
      %v2212 = vunpack.c.h.b16 %v1844
      %v2213 = vunpack.c.h.b16 %v1845
      %v2214 = vunpack.c.h.b16 %v1846
      %v2215 = vunpack.c.h.b16 %v1847
      %v2216 = vunpack.c.h.b16 %v1848
      %v2217 = vunpack.c.h.b16 %v1849
      %v2218 = vunpack.c.h.b16 %v1850
      %v2219 = vunpack.c.h.b16 %v1851
      %v2220 = vunpack.c.h.b16 %v1852
      %v2221 = vunpack.c.h.b16 %v1853
      %v2222 = vunpack.c.h.b16 %v1854
      %v2223 = vunpack.c.h.b16 %v1855
      %v2224 = vunpack.c.h.b16 %v1856
      %v2225 = vunpack.c.h.b16 %v1857
      %v2226 = vunpack.c.h.b16 %v1858
      %v2227 = vunpack.c.h.b16 %v1859
      %v2228 = vunpack.c.l.b16 %v1860
      %v2229 = vunpack.c.l.b16 %v1861
      %v2230 = vunpack.c.l.b16 %v1862
      %v2231 = vunpack.c.l.b16 %v1863
      %v2232 = vunpack.c.l.b16 %v1864
      %v2233 = vunpack.c.l.b16 %v1865
      %v2234 = vunpack.c.l.b16 %v1866
      %v2235 = vunpack.c.l.b16 %v1867
      %v2236 = vunpack.c.l.b16 %v1868
      %v2237 = vunpack.c.l.b16 %v1869
      %v2238 = vunpack.c.l.b16 %v1870
      %v2239 = vunpack.c.l.b16 %v1871
      %v2240 = vunpack.c.l.b16 %v1872
      %v2241 = vunpack.c.l.b16 %v1873
      %v2242 = vunpack.c.l.b16 %v1874
      %v2243 = vunpack.c.l.b16 %v1875
      %v2244 = vunpack.c.h.b16 %v1860
      %v2245 = vunpack.c.h.b16 %v1861
      %v2246 = vunpack.c.h.b16 %v1862
      %v2247 = vunpack.c.h.b16 %v1863
      %v2248 = vunpack.c.h.b16 %v1864
      %v2249 = vunpack.c.h.b16 %v1865
      %v2250 = vunpack.c.h.b16 %v1866
      %v2251 = vunpack.c.h.b16 %v1867
      %v2252 = vunpack.c.h.b16 %v1868
      %v2253 = vunpack.c.h.b16 %v1869
      %v2254 = vunpack.c.h.b16 %v1870
      %v2255 = vunpack.c.h.b16 %v1871
      %v2256 = vunpack.c.h.b16 %v1872
      %v2257 = vunpack.c.h.b16 %v1873
      %v2258 = vunpack.c.h.b16 %v1874
      %v2259 = vunpack.c.h.b16 %v1875
      %v2260 = vpack.c.b16 %v2005, %v2004
      %v2261 = vpack.c.b16 %v2007, %v2006
      %v2262 = vpack.c.b16 %v2009, %v2008
      %v2263 = vpack.c.b16 %v2011, %v2010
      %v2264 = vpack.c.b16 %v2013, %v2012
      %v2265 = vpack.c.b16 %v2015, %v2014
      %v2266 = vpack.c.b16 %v2017, %v2016
      %v2267 = vpack.c.b16 %v2019, %v2018
      %v2268 = vpack.c.b16 %v2021, %v2020
      %v2269 = vpack.c.b16 %v2023, %v2022
      %v2270 = vpack.c.b16 %v2025, %v2024
      %v2271 = vpack.c.b16 %v2027, %v2026
      %v2272 = vpack.c.b16 %v2029, %v2028
      %v2273 = vpack.c.b16 %v2031, %v2030
      %v2274 = vpack.c.b16 %v2033, %v2032
      %v2275 = vpack.c.b16 %v2035, %v2034
      %v2276 = vpack.c.b16 %v2037, %v2036
      %v2277 = vpack.c.b16 %v2039, %v2038
      %v2278 = vpack.c.b16 %v2041, %v2040
      %v2279 = vpack.c.b16 %v2043, %v2042
      %v2280 = vpack.c.b16 %v2045, %v2044
      %v2281 = vpack.c.b16 %v2047, %v2046
      %v2282 = vpack.c.b16 %v2049, %v2048
      %v2283 = vpack.c.b16 %v2051, %v2050
      %v2284 = vpack.c.b16 %v2053, %v2052
      %v2285 = vpack.c.b16 %v2055, %v2054
      %v2286 = vpack.c.b16 %v2057, %v2056
      %v2287 = vpack.c.b16 %v2059, %v2058
      %v2288 = vpack.c.b16 %v2061, %v2060
      %v2289 = vpack.c.b16 %v2063, %v2062
      %v2290 = vpack.c.b16 %v2065, %v2064
      %v2291 = vpack.c.b16 %v2067, %v2066
      %v2292 = vpack.c.b16 %v2069, %v2068
      %v2293 = vpack.c.b16 %v2071, %v2070
      %v2294 = vpack.c.b16 %v2073, %v2072
      %v2295 = vpack.c.b16 %v2075, %v2074
      %v2296 = vpack.c.b16 %v2077, %v2076
      %v2297 = vpack.c.b16 %v2079, %v2078
      %v2298 = vpack.c.b16 %v2081, %v2080
      %v2299 = vpack.c.b16 %v2083, %v2082
      %v2300 = vpack.c.b16 %v2085, %v2084
      %v2301 = vpack.c.b16 %v2087, %v2086
      %v2302 = vpack.c.b16 %v2089, %v2088
      %v2303 = vpack.c.b16 %v2091, %v2090
      %v2304 = vpack.c.b16 %v2093, %v2092
      %v2305 = vpack.c.b16 %v2095, %v2094
      %v2306 = vpack.c.b16 %v2097, %v2096
      %v2307 = vpack.c.b16 %v2099, %v2098
      %v2308 = vpack.c.b16 %v2101, %v2100
      %v2309 = vpack.c.b16 %v2103, %v2102
      %v2310 = vpack.c.b16 %v2105, %v2104
      %v2311 = vpack.c.b16 %v2107, %v2106
      %v2312 = vpack.c.b16 %v2109, %v2108
      %v2313 = vpack.c.b16 %v2111, %v2110
      %v2314 = vpack.c.b16 %v2113, %v2112
      %v2315 = vpack.c.b16 %v2115, %v2114
      %v2316 = vpack.c.b16 %v2117, %v2116
      %v2317 = vpack.c.b16 %v2119, %v2118
      %v2318 = vpack.c.b16 %v2121, %v2120
      %v2319 = vpack.c.b16 %v2123, %v2122
      %v2320 = vpack.c.b16 %v2125, %v2124
      %v2321 = vpack.c.b16 %v2127, %v2126
      %v2322 = vpack.c.b16 %v2129, %v2128
      %v2323 = vpack.c.b16 %v2131, %v2130
      %v2324 = vpack.c.b16 %v2133, %v2132
      %v2325 = vpack.c.b16 %v2135, %v2134
      %v2326 = vpack.c.b16 %v2137, %v2136
      %v2327 = vpack.c.b16 %v2139, %v2138
      %v2328 = vpack.c.b16 %v2141, %v2140
      %v2329 = vpack.c.b16 %v2143, %v2142
      %v2330 = vpack.c.b16 %v2145, %v2144
      %v2331 = vpack.c.b16 %v2147, %v2146
      %v2332 = vpack.c.b16 %v2149, %v2148
      %v2333 = vpack.c.b16 %v2151, %v2150
      %v2334 = vpack.c.b16 %v2153, %v2152
      %v2335 = vpack.c.b16 %v2155, %v2154
      %v2336 = vpack.c.b16 %v2157, %v2156
      %v2337 = vpack.c.b16 %v2159, %v2158
      %v2338 = vpack.c.b16 %v2161, %v2160
      %v2339 = vpack.c.b16 %v2163, %v2162
      %v2340 = vpack.c.b16 %v2165, %v2164
      %v2341 = vpack.c.b16 %v2167, %v2166
      %v2342 = vpack.c.b16 %v2169, %v2168
      %v2343 = vpack.c.b16 %v2171, %v2170
      %v2344 = vpack.c.b16 %v2173, %v2172
      %v2345 = vpack.c.b16 %v2175, %v2174
      %v2346 = vpack.c.b16 %v2177, %v2176
      %v2347 = vpack.c.b16 %v2179, %v2178
      %v2348 = vpack.c.b16 %v2181, %v2180
      %v2349 = vpack.c.b16 %v2183, %v2182
      %v2350 = vpack.c.b16 %v2185, %v2184
      %v2351 = vpack.c.b16 %v2187, %v2186
      %v2352 = vpack.c.b16 %v2189, %v2188
      %v2353 = vpack.c.b16 %v2191, %v2190
      %v2354 = vpack.c.b16 %v2193, %v2192
      %v2355 = vpack.c.b16 %v2195, %v2194
      %v2356 = vpack.c.b16 %v2197, %v2196
      %v2357 = vpack.c.b16 %v2199, %v2198
      %v2358 = vpack.c.b16 %v2201, %v2200
      %v2359 = vpack.c.b16 %v2203, %v2202
      %v2360 = vpack.c.b16 %v2205, %v2204
      %v2361 = vpack.c.b16 %v2207, %v2206
      %v2362 = vpack.c.b16 %v2209, %v2208
      %v2363 = vpack.c.b16 %v2211, %v2210
      %v2364 = vpack.c.b16 %v2213, %v2212
      %v2365 = vpack.c.b16 %v2215, %v2214
      %v2366 = vpack.c.b16 %v2217, %v2216
      %v2367 = vpack.c.b16 %v2219, %v2218
      %v2368 = vpack.c.b16 %v2221, %v2220
      %v2369 = vpack.c.b16 %v2223, %v2222
      %v2370 = vpack.c.b16 %v2225, %v2224
      %v2371 = vpack.c.b16 %v2227, %v2226
      %v2372 = vpack.c.b16 %v2229, %v2228
      %v2373 = vpack.c.b16 %v2231, %v2230
      %v2374 = vpack.c.b16 %v2233, %v2232
      %v2375 = vpack.c.b16 %v2235, %v2234
      %v2376 = vpack.c.b16 %v2237, %v2236
      %v2377 = vpack.c.b16 %v2239, %v2238
      %v2378 = vpack.c.b16 %v2241, %v2240
      %v2379 = vpack.c.b16 %v2243, %v2242
      %v2380 = vpack.c.b16 %v2245, %v2244
      %v2381 = vpack.c.b16 %v2247, %v2246
      %v2382 = vpack.c.b16 %v2249, %v2248
      %v2383 = vpack.c.b16 %v2251, %v2250
      %v2384 = vpack.c.b16 %v2253, %v2252
      %v2385 = vpack.c.b16 %v2255, %v2254
      %v2386 = vpack.c.b16 %v2257, %v2256
      %v2387 = vpack.c.b16 %v2259, %v2258
      %2516 = vst [vmem:[%s215] sm:$0xff] %v2260
      %2517 = vst [vmem:[%s215 + $0x8] sm:$0xff] %v2261
      %2518 = vst [vmem:[%s215 + $0x10] sm:$0xff] %v2262
      %2519 = vst [vmem:[%s215 + $0x18] sm:$0xff] %v2263
      %2520 = vst [vmem:[%s215 + $0x20] sm:$0xff] %v2264
      %2521 = vst [vmem:[%s215 + $0x28] sm:$0xff] %v2265
      %2522 = vst [vmem:[%s215 + $0x30] sm:$0xff] %v2266
      %2523 = vst [vmem:[%s215 + $0x38] sm:$0xff] %v2267
      %2524 = vst [vmem:[%s215 + $0x40] sm:$0xff] %v2268
      %2525 = vst [vmem:[%s215 + $0x48] sm:$0xff] %v2269
      %2526 = vst [vmem:[%s215 + $0x50] sm:$0xff] %v2270
      %2527 = vst [vmem:[%s215 + $0x58] sm:$0xff] %v2271
      %2528 = vst [vmem:[%s215 + $0x60] sm:$0xff] %v2272
      %2529 = vst [vmem:[%s215 + $0x68] sm:$0xff] %v2273
      %2530 = vst [vmem:[%s215 + $0x70] sm:$0xff] %v2274
      %2531 = vst [vmem:[%s215 + $0x78] sm:$0xff] %v2275
      %2532 = vst [vmem:[%s215 + $0x80] sm:$0xff] %v2276
      %2533 = vst [vmem:[%s215 + $0x88] sm:$0xff] %v2277
      %2534 = vst [vmem:[%s215 + $0x90] sm:$0xff] %v2278
      %2535 = vst [vmem:[%s215 + $0x98] sm:$0xff] %v2279
      %2536 = vst [vmem:[%s215 + $0xa0] sm:$0xff] %v2280
      %2537 = vst [vmem:[%s215 + $0xa8] sm:$0xff] %v2281
      %2538 = vst [vmem:[%s215 + $0xb0] sm:$0xff] %v2282
      %2539 = vst [vmem:[%s215 + $0xb8] sm:$0xff] %v2283
      %2540 = vst [vmem:[%s215 + $0xc0] sm:$0xff] %v2284
      %2541 = vst [vmem:[%s215 + $0xc8] sm:$0xff] %v2285
      %2542 = vst [vmem:[%s215 + $0xd0] sm:$0xff] %v2286
      %2543 = vst [vmem:[%s215 + $0xd8] sm:$0xff] %v2287
      %2544 = vst [vmem:[%s215 + $0xe0] sm:$0xff] %v2288
      %2545 = vst [vmem:[%s215 + $0xe8] sm:$0xff] %v2289
      %2546 = vst [vmem:[%s215 + $0xf0] sm:$0xff] %v2290
      %2547 = vst [vmem:[%s215 + $0xf8] sm:$0xff] %v2291
      %2548 = vst [vmem:[%s215 + $0x100] sm:$0xff] %v2292
      %2549 = vst [vmem:[%s215 + $0x108] sm:$0xff] %v2293
      %2550 = vst [vmem:[%s215 + $0x110] sm:$0xff] %v2294
      %2551 = vst [vmem:[%s215 + $0x118] sm:$0xff] %v2295
      %2552 = vst [vmem:[%s215 + $0x120] sm:$0xff] %v2296
      %2553 = vst [vmem:[%s215 + $0x128] sm:$0xff] %v2297
      %2554 = vst [vmem:[%s215 + $0x130] sm:$0xff] %v2298
      %2555 = vst [vmem:[%s215 + $0x138] sm:$0xff] %v2299
      %2556 = vst [vmem:[%s215 + $0x140] sm:$0xff] %v2300
      %2557 = vst [vmem:[%s215 + $0x148] sm:$0xff] %v2301
      %2558 = vst [vmem:[%s215 + $0x150] sm:$0xff] %v2302
      %2559 = vst [vmem:[%s215 + $0x158] sm:$0xff] %v2303
      %2560 = vst [vmem:[%s215 + $0x160] sm:$0xff] %v2304
      %2561 = vst [vmem:[%s215 + $0x168] sm:$0xff] %v2305
      %2562 = vst [vmem:[%s215 + $0x170] sm:$0xff] %v2306
      %2563 = vst [vmem:[%s215 + $0x178] sm:$0xff] %v2307
      %2564 = vst [vmem:[%s215 + $0x180] sm:$0xff] %v2308
      %2565 = vst [vmem:[%s215 + $0x188] sm:$0xff] %v2309
      %2566 = vst [vmem:[%s215 + $0x190] sm:$0xff] %v2310
      %2567 = vst [vmem:[%s215 + $0x198] sm:$0xff] %v2311
      %2568 = vst [vmem:[%s215 + $0x1a0] sm:$0xff] %v2312
      %2569 = vst [vmem:[%s215 + $0x1a8] sm:$0xff] %v2313
      %2570 = vst [vmem:[%s215 + $0x1b0] sm:$0xff] %v2314
      %2571 = vst [vmem:[%s215 + $0x1b8] sm:$0xff] %v2315
      %2572 = vst [vmem:[%s215 + $0x1c0] sm:$0xff] %v2316
      %2573 = vst [vmem:[%s215 + $0x1c8] sm:$0xff] %v2317
      %2574 = vst [vmem:[%s215 + $0x1d0] sm:$0xff] %v2318
      %2575 = vst [vmem:[%s215 + $0x1d8] sm:$0xff] %v2319
      %2576 = vst [vmem:[%s215 + $0x1e0] sm:$0xff] %v2320
      %2577 = vst [vmem:[%s215 + $0x1e8] sm:$0xff] %v2321
      %2578 = vst [vmem:[%s215 + $0x1f0] sm:$0xff] %v2322
      %2579 = vst [vmem:[%s215 + $0x1f8] sm:$0xff] %v2323
      %2580 = vst [vmem:[%s215 + $0x200] sm:$0xff] %v2324
      %2581 = vst [vmem:[%s215 + $0x208] sm:$0xff] %v2325
      %2582 = vst [vmem:[%s215 + $0x210] sm:$0xff] %v2326
      %2583 = vst [vmem:[%s215 + $0x218] sm:$0xff] %v2327
      %2584 = vst [vmem:[%s215 + $0x220] sm:$0xff] %v2328
      %2585 = vst [vmem:[%s215 + $0x228] sm:$0xff] %v2329
      %2586 = vst [vmem:[%s215 + $0x230] sm:$0xff] %v2330
      %2587 = vst [vmem:[%s215 + $0x238] sm:$0xff] %v2331
      %2588 = vst [vmem:[%s215 + $0x240] sm:$0xff] %v2332
      %2589 = vst [vmem:[%s215 + $0x248] sm:$0xff] %v2333
      %2590 = vst [vmem:[%s215 + $0x250] sm:$0xff] %v2334
      %2591 = vst [vmem:[%s215 + $0x258] sm:$0xff] %v2335
      %2592 = vst [vmem:[%s215 + $0x260] sm:$0xff] %v2336
      %2593 = vst [vmem:[%s215 + $0x268] sm:$0xff] %v2337
      %2594 = vst [vmem:[%s215 + $0x270] sm:$0xff] %v2338
      %2595 = vst [vmem:[%s215 + $0x278] sm:$0xff] %v2339
      %2596 = vst [vmem:[%s215 + $0x280] sm:$0xff] %v2340
      %2597 = vst [vmem:[%s215 + $0x288] sm:$0xff] %v2341
      %2598 = vst [vmem:[%s215 + $0x290] sm:$0xff] %v2342
      %2599 = vst [vmem:[%s215 + $0x298] sm:$0xff] %v2343
      %2600 = vst [vmem:[%s215 + $0x2a0] sm:$0xff] %v2344
      %2601 = vst [vmem:[%s215 + $0x2a8] sm:$0xff] %v2345
      %2602 = vst [vmem:[%s215 + $0x2b0] sm:$0xff] %v2346
      %2603 = vst [vmem:[%s215 + $0x2b8] sm:$0xff] %v2347
      %2604 = vst [vmem:[%s215 + $0x2c0] sm:$0xff] %v2348
      %2605 = vst [vmem:[%s215 + $0x2c8] sm:$0xff] %v2349
      %2606 = vst [vmem:[%s215 + $0x2d0] sm:$0xff] %v2350
      %2607 = vst [vmem:[%s215 + $0x2d8] sm:$0xff] %v2351
      %2608 = vst [vmem:[%s215 + $0x2e0] sm:$0xff] %v2352
      %2609 = vst [vmem:[%s215 + $0x2e8] sm:$0xff] %v2353
      %2610 = vst [vmem:[%s215 + $0x2f0] sm:$0xff] %v2354
      %2611 = vst [vmem:[%s215 + $0x2f8] sm:$0xff] %v2355
      %2612 = vst [vmem:[%s215 + $0x300] sm:$0xff] %v2356
      %2613 = vst [vmem:[%s215 + $0x308] sm:$0xff] %v2357
      %2614 = vst [vmem:[%s215 + $0x310] sm:$0xff] %v2358
      %2615 = vst [vmem:[%s215 + $0x318] sm:$0xff] %v2359
      %2616 = vst [vmem:[%s215 + $0x320] sm:$0xff] %v2360
      %2617 = vst [vmem:[%s215 + $0x328] sm:$0xff] %v2361
      %2618 = vst [vmem:[%s215 + $0x330] sm:$0xff] %v2362
      %2619 = vst [vmem:[%s215 + $0x338] sm:$0xff] %v2363
      %2620 = vst [vmem:[%s215 + $0x340] sm:$0xff] %v2364
      %2621 = vst [vmem:[%s215 + $0x348] sm:$0xff] %v2365
      %2622 = vst [vmem:[%s215 + $0x350] sm:$0xff] %v2366
      %2623 = vst [vmem:[%s215 + $0x358] sm:$0xff] %v2367
      %2624 = vst [vmem:[%s215 + $0x360] sm:$0xff] %v2368
      %2625 = vst [vmem:[%s215 + $0x368] sm:$0xff] %v2369
      %2626 = vst [vmem:[%s215 + $0x370] sm:$0xff] %v2370
      %2627 = vst [vmem:[%s215 + $0x378] sm:$0xff] %v2371
      %2628 = vst [vmem:[%s215 + $0x380] sm:$0xff] %v2372
      %2629 = vst [vmem:[%s215 + $0x388] sm:$0xff] %v2373
      %2630 = vst [vmem:[%s215 + $0x390] sm:$0xff] %v2374
      %2631 = vst [vmem:[%s215 + $0x398] sm:$0xff] %v2375
      %2632 = vst [vmem:[%s215 + $0x3a0] sm:$0xff] %v2376
      %2633 = vst [vmem:[%s215 + $0x3a8] sm:$0xff] %v2377
      %2634 = vst [vmem:[%s215 + $0x3b0] sm:$0xff] %v2378
      %2635 = vst [vmem:[%s215 + $0x3b8] sm:$0xff] %v2379
      %2636 = vst [vmem:[%s215 + $0x3c0] sm:$0xff] %v2380
      %2637 = vst [vmem:[%s215 + $0x3c8] sm:$0xff] %v2381
      %2638 = vst [vmem:[%s215 + $0x3d0] sm:$0xff] %v2382
      %2639 = vst [vmem:[%s215 + $0x3d8] sm:$0xff] %v2383
      %2640 = vst [vmem:[%s215 + $0x3e0] sm:$0xff] %v2384
      %2641 = vst [vmem:[%s215 + $0x3e8] sm:$0xff] %v2385
      %2642 = vst [vmem:[%s215 + $0x3f0] sm:$0xff] %v2386
      %2643 = vst [vmem:[%s215 + $0x3f8] sm:$0xff] %v2387
      %s2644 = smul.u32 16, %s18
      %s2645 = smul.u32 16, %s19
      %p2646 = scmp.lt.s32.totalorder %s2644, 31
      %s2647 = scalar_select %p2646, %s2644, 31
      %p2648 = scmp.lt.s32.totalorder %s2645, 15
      %s2649 = scalar_select %p2648, %s2645, 15
      %s2650 = smul.addr %s2647, 16
      %s2651 = sadd.s32 %s2649, %s2650
      %s2652 = smul.addr %s2651, 4
      %s2653 = scalar_lea.vmem %s3, %s2652
      // Predicated region
      $region33: #{upsampling_deconv_block.1} parent=31 // pred_check
        %p2654 = pneg %p116
      $region34: #{upsampling_deconv_block.1} parent=31 // pred_check_branch
        %2656 = sbr.rel (%p2654) target = $region36
      $region35: #{upsampling_deconv_block.1} parent=31 // pred_region
        %s2657 = smul.u32 16, %s18
        %s2658 = smul.u32 16, %s19
      $region36: #{upsampling_deconv_block.1} parent=31 // pred_fallthru
        _
    $region32: #{upsampling_deconv_block.1} parent=5 // pred_fallthru
      _
    %p2659 = scmp.le.s32.totalorder 2, %s9
    // Predicated region
    $region37: #{upsampling_deconv_block.1} parent=5 // pred_check
      %p2660 = pneg %p2659
    $region38: #{upsampling_deconv_block.1} parent=5 // pred_check_branch
      %2662 = sbr.rel (%p2660) target = $region40
    $region39: #{upsampling_deconv_block.1} parent=5 // pred_region
      %s2663 = ssub.s32 %s9, 2
      // Predicated region
      $region41: #{upsampling_deconv_block.1} parent=39 // pred_check
        %p2664 = pneg %p122
      $region42: #{upsampling_deconv_block.1} parent=39 // pred_check_branch
        %2666 = sbr.rel (%p2664) target = $region44
      $region43: #{upsampling_deconv_block.1} parent=39 // pred_region
        %s2667 = smul.u32 16, %s20
        %s2668 = smul.u32 16, %s21
        %p2669 = scmp.lt.s32.totalorder %s2667, 31
        %s2670 = scalar_select %p2669, %s2667, 31
        %p2671 = scmp.lt.s32.totalorder %s2668, 15
        %s2672 = scalar_select %p2671, %s2668, 15
        %s2673 = smul.addr %s2670, 16
        %s2674 = sadd.s32 %s2672, %s2673
        %s2675 = smul.addr %s2674, 4
        %s2676 = scalar_lea.vmem %s3, %s2675
      $region44: #{upsampling_deconv_block.1} parent=39 // pred_fallthru
        _
    $region40: #{upsampling_deconv_block.1} parent=5 // pred_fallthru
      _
  $region6: #{upsampling_deconv_block.1} parent=0 // loop_footer
    %s13 = sadd.s32 1, %s9
  $region7: #{upsampling_deconv_block.1} parent=0 // loop_footer_branch
    %8 = sbr.rel target = $region3
  $region8: #{upsampling_deconv_block.1} parent=0 // loop_exit
    _

</llo_original>
